<compile_context>
chip_gen: v7x
topology: tpu7x:2x2x1
jax: 0.10.0
libtpu: 0.0.40
codegen_flags: <defaults>
</compile_context>

<pallas_src>
import jax
import jax.numpy as jnp
from jax.experimental import pallas as pl
from jax.experimental.pallas import tpu as pltpu

# ----------------------------- static config -------------------------------
N      = 2      # batch
C      = 4      # n_channel   (22 in the paper config)
T      = 136    # input_length (chosen so pooled time == 30)
S      = 4      # n_spatial   (12 in the paper config)
NF     = 3      # n_fir = len(fir_list)
L      = 9      # fir_length
POOL   = 12     # pool_size
STRIDE = 4      # pool_stride
D      = 30     # DRConv output channels (fixed by ITNet / randperm(30))
NCLASS = 4      # n_class
TP     = T - L + 1                   # time after TemporalConv (valid conv) = 128
P      = (TP - POOL) // STRIDE + 1   # time after AvgPool = 30
BN_EPS = 1e-5
PD_EPS = 1e-6                        # F.pairwise_distance eps

assert P == 30 and D == 30, "pooled time must be 30 (g[:, :, randperm(30)])"
assert T % 8 == 0 and TP == 128 and N * P <= 128

# constant-slab row offsets (128-lane f32 slab)
ROW_WID  = 0                 # (8,128)   block-diag IDConv weights      [:, :N*C]
ROW_GB   = 8                 # (8,128)   row0=gamma, row1=beta          [:, :NF]
ROW_POOL = 16                # (256,128) block-diag AvgPool matrix
ROW_PERM = 272               # (128,128) block-diag time permutation
ROW_WDR  = 400               # (32,128)  DRConv (D, NF*S)               [:D, :NF*S]
ROW_WCLS = 432               # (8,128)   ClassConv (NCLASS, D)          [:NCLASS, :D]
SLAB_ROWS = 440


# ------------------------------- kernel ------------------------------------
def itnet_kernel(x_ref, band_ref, slab_ref, sel_ref, out_ref, sqc_ref):
    f32 = jnp.float32

    # ---- IDConv_t == IDConv_s (shared weights, x_s = x_t): one spatial mix ----
    y = jnp.dot(slab_ref[ROW_WID:ROW_WID + N * S, 0:N * C], x_ref[...],
                preferred_element_type=f32)                              # (N*S, T)

    # ---- TemporalConv (+ folded TransConv) for BOTH paths: one bf16 matmul ----
    z = jnp.dot(y.astype(jnp.bfloat16), band_ref[0:T, :],
                preferred_element_type=f32)                              # (N*S, 2*NF*TP)

    # ---- BatchNorm2d training stats over cat([x_t_s, x_s], 0), vectorized ----
    sel = sel_ref[...]                                                   # (2*NF*TP, 8)
    s1 = jnp.sum(jnp.dot(z, sel, preferred_element_type=f32),
                 axis=0, keepdims=True)                                  # (1, 8)
    s2 = jnp.sum(jnp.dot(z * z, sel, preferred_element_type=f32),
                 axis=0, keepdims=True)                                  # (1, 8)
    inv_cnt = 1.0 / float(2 * N * TP * S)
    mean = s1 * inv_cnt
    var = jnp.maximum(s2 * inv_cnt - mean * mean, 0.0)                   # clamp >= 0
    gamma = slab_ref[ROW_GB:ROW_GB + 1, 0:8]
    beta = slab_ref[ROW_GB + 1:ROW_GB + 2, 0:8]
    scale = gamma * jax.lax.rsqrt(var + BN_EPS)                          # (1, 8)
    shift = beta - mean * scale
    expand = band_ref[T:T + 8, 0:NF * TP].astype(f32)                    # (8, NF*TP) one-hot
    sv = jnp.dot(jnp.concatenate([scale, shift], axis=0), expand,
                 preferred_element_type=f32)                             # (2, NF*TP)

    # ---- normalize + square the x_t_s half, bank-transposed into scratch ----
    for f in range(NF):
        c0 = f * TP
        h = z[:, c0:c0 + TP] * sv[0:1, c0:c0 + TP] + sv[1:2, c0:c0 + TP]
        sq = h * h                                                       # (N*S, TP)
        sqc_ref[f * S:(f + 1) * S, 0:TP] = sq[0:S, :]                    # batch 0
        sqc_ref[f * S:(f + 1) * S, TP:2 * TP] = sq[S:2 * S, :]           # batch 1

    # ---- AvgPool (block-diag over batch) then DRConv: two matmuls ----
    pooled = jnp.dot(sqc_ref[...], slab_ref[ROW_POOL:ROW_POOL + N * TP, :],
                     preferred_element_type=f32)                         # (NF*S, 128)
    xdr = jnp.dot(slab_ref[ROW_WDR:ROW_WDR + D, 0:NF * S], pooled,
                  preferred_element_type=f32)                            # (D, 128)

    # ---- LogSoftmax over the 30 DR channels; g = sigmoid(3 * logsoftmax) ----
    m = jnp.max(xdr, axis=0, keepdims=True)
    e = jnp.exp(xdr - m)
    lse = jnp.log(jnp.sum(e, axis=0, keepdims=True)) + m
    ls = xdr - lse
    g = pl.reciprocal(1.0 + jnp.exp(-3.0 * ls), approx=True)             # (D, 128)

    # ---- dis = mean |g - g[:, :, perm] + eps| (perm over pooled time) ----
    gp = jnp.dot(g, slab_ref[ROW_PERM:ROW_PERM + 128, :],
                 preferred_element_type=f32)                             # (D, 128)
    lane = jax.lax.broadcasted_iota(jnp.int32, (D, 128), 1)
    dsum = jnp.sum(jnp.where(lane < N * P, jnp.abs(g - gp + PD_EPS), 0.0))
    dis_val = dsum * (1.0 / float(N * D * P))

    # ---- ClassConv + LogSoftmax over classes ----
    xc = jnp.dot(slab_ref[ROW_WCLS:ROW_WCLS + 2 * NCLASS, 0:D], xdr,
                 preferred_element_type=f32)                             # (8, 128)
    xc4 = xc[0:NCLASS, :]
    mc = jnp.max(xc4, axis=0, keepdims=True)
    lsec = jnp.log(jnp.sum(jnp.exp(xc4 - mc), axis=0, keepdims=True)) + mc
    out_full = xc - lsec                                                 # rows >= NCLASS unused

    # pack `dis` into the unused (NCLASS, 0) slot -> single lane-dense store
    ri = jax.lax.broadcasted_iota(jnp.int32, (2 * NCLASS, 128), 0)
    ci = jax.lax.broadcasted_iota(jnp.int32, (2 * NCLASS, 128), 1)
    out_ref[...] = jnp.where((ri == NCLASS) & (ci == 0), dis_val, out_full)


# ------------------------------- wrapper ------------------------------------
@jax.jit
def itnet_forward(x_t, x_s, params):
    del x_s                                   # ITNet.forward does x_s = x_t
    # PyTorch NCHW (N, C, T, 1) -> (N*C, T): time on lanes.
    x_in = x_t[..., 0].reshape(N * C, T).astype(jnp.float32)

    vmem = pl.BlockSpec(memory_space=pltpu.MemorySpace.VMEM)
    res = pl.pallas_call(
        itnet_kernel,
        out_shape=jax.ShapeDtypeStruct((2 * NCLASS, 128), jnp.float32),
        in_specs=[vmem, vmem, vmem, vmem],
        out_specs=vmem,
        scratch_shapes=[pltpu.VMEM((NF * S, N * TP), jnp.float32)],
    )(x_in, params["band_slab"], params["slab"], params["sel"])

    logits = res[:NCLASS, :N * P].reshape(NCLASS, N, P).transpose(1, 0, 2)  # (N, NCLASS, P)
    dis = res[NCLASS, 0]
    return logits, dis


def make_params(key):
    kid, kfir, kg, kb, kdr, kcl, kperm = jax.random.split(key, 7)
    f32 = jnp.float32

    # IDConv weight (S, 1, 1, C); IDConv_t and IDConv_s share it (torch init).
    w_spatial = 0.1 * jax.random.normal(kid, (S, C), f32)
    w_id_blk = jnp.kron(jnp.eye(N, dtype=f32), w_spatial)                 # (N*S, N*C)

    # TemporalConv FIR taps (deterministic stand-in for my_filter); TransConv
    # initialized to identity and folded into the x_t-path taps.
    w_fir = 0.2 * jax.random.normal(kfir, (NF, L), f32)
    w_trans = jnp.eye(NF, dtype=f32)
    taps_t = w_trans @ w_fir
    taps_s = w_fir

    t_idx = jnp.arange(T)[:, None]
    tp_idx = jnp.arange(TP)[None, :]
    k = t_idx - tp_idx
    valid = (k >= 0) & (k < L)
    kidx = jnp.clip(k, 0, L - 1)

    def make_band(taps):
        b = jnp.where(valid[None], taps[:, kidx], 0.0)                    # (NF, T, TP)
        return jnp.transpose(b, (1, 0, 2)).reshape(T, NF * TP)

    band_cat = jnp.concatenate([make_band(taps_t), make_band(taps_s)], axis=1)  # (T, 2*NF*TP)

    # Bank -> lane expansion matrix appended to the band slab (0/1, exact bf16).
    e_block = jnp.zeros((8, 2 * NF * TP), f32)
    for f in range(NF):
        e_block = e_block.at[f, f * TP:(f + 1) * TP].set(1.0)
    band_slab = jnp.concatenate([band_cat, e_block], axis=0).astype(jnp.bfloat16)  # (144, 768)

    # Bank selector over both halves of z (for BN statistics).
    sel = jnp.zeros((2 * NF * TP, 8), f32)
    for f in range(NF):
        sel = sel.at[f * TP:(f + 1) * TP, f].set(1.0)
        sel = sel.at[NF * TP + f * TP:NF * TP + (f + 1) * TP, f].set(1.0)

    # BatchNorm affine params (pretrained in the original; deterministic here).
    gamma = 1.0 + 0.1 * jax.random.normal(kg, (NF,), f32)
    beta = 0.1 * jax.random.normal(kb, (NF,), f32)

    # AvgPool2d((POOL,1),(STRIDE,1)) as a block-diagonal (N*TP, 128) matrix.
    tp_r = jnp.arange(TP)[:, None]
    p_c = jnp.arange(P)[None, :]
    win = ((tp_r >= p_c * STRIDE) & (tp_r < p_c * STRIDE + POOL)).astype(f32) / float(POOL)
    pool_bd = jnp.zeros((N * TP, 128), f32)
    for n in range(N):
        pool_bd = pool_bd.at[n * TP:(n + 1) * TP, n * P:(n + 1) * P].set(win)

    # DRConv (D, NF, 1, S) -> flat (D, NF*S); ClassConv (NCLASS, D).
    w_dr = 0.1 * jax.random.normal(kdr, (D, NF, S), f32)
    w_dr_flat = w_dr.reshape(D, NF * S)
    w_cls = 0.1 * jax.random.normal(kcl, (NCLASS, D), f32)

    # Fixed stand-in for torch.randperm(30), as a block-diag lane permutation.
    perm = jax.random.permutation(kperm, P)
    perm_small = (jnp.arange(P)[:, None] == perm[None, :]).astype(f32)    # (P, P)
    perm_big = jnp.zeros((128, 128), f32)
    for n in range(N):
        perm_big = perm_big.at[n * P:(n + 1) * P, n * P:(n + 1) * P].set(perm_small)

    # ---- pack the small constants into one 128-lane f32 slab ----
    wid_rows = jnp.pad(w_id_blk, ((0, 0), (0, 128 - N * C)))              # (8, 128)
    gb_rows = jnp.zeros((8, 128), f32).at[0, :NF].set(gamma).at[1, :NF].set(beta)
    wdr_rows = jnp.zeros((32, 128), f32).at[:D, :NF * S].set(w_dr_flat)
    wcls_rows = jnp.zeros((8, 128), f32).at[:NCLASS, :D].set(w_cls)
    slab = jnp.concatenate([wid_rows, gb_rows, pool_bd, perm_big, wdr_rows, wcls_rows], axis=0)
    assert slab.shape == (SLAB_ROWS, 128)

    return dict(band_slab=band_slab, slab=slab, sel=sel)


if __name__ == "__main__":
    key = jax.random.PRNGKey(0)
    kx, kp = jax.random.split(key)
    # PyTorch NCHW input: (batch, eeg_channel, time, 1)
    x_t = jax.random.normal(kx, (N, C, T, 1), jnp.float32)
    x_s = x_t                                   # forward overwrites x_s with x_t anyway
    params = make_params(kp)

    x_out, dis = itnet_forward(x_t, x_s, params)
    jax.block_until_ready((x_out, dis))

    assert x_out.shape == (N, NCLASS, P), x_out.shape
    assert bool(jnp.all(jnp.isfinite(x_out))) and bool(jnp.isfinite(dis))
    # log-softmax sanity: class probabilities sum to 1
    assert bool(jnp.allclose(jnp.sum(jnp.exp(x_out), axis=1), 1.0, atol=1e-3))
    print("KERNEL_OK")
</pallas_src>

<mosaic_0001>
module attributes {stable_mosaic.version = 11 : i64} {
  func.func @itnet_kernel(%arg0: memref<8x136xf32, #tpu.memory_space<vmem>>, %arg1: memref<144x768xbf16, #tpu.memory_space<vmem>>, %arg2: memref<440x128xf32, #tpu.memory_space<vmem>>, %arg3: memref<768x8xf32, #tpu.memory_space<vmem>>, %arg4: memref<8x128xf32, #tpu.memory_space<vmem>>, %arg5: memref<12x256xf32, #tpu.memory_space<vmem>>) attributes {dimension_semantics = [], scalar_prefetch = 0 : i64, scratch_operands = 1 : i64, tpu.core_type = #tpu.core_type<tc>} {
    %c0 = arith.constant 0 : index
    %c0_0 = arith.constant 0 : index
    %0 = vector.load %arg2[%c0, %c0_0] : memref<440x128xf32, #tpu.memory_space<vmem>>, vector<8x8xf32>
    %c0_1 = arith.constant 0 : index
    %c0_2 = arith.constant 0 : index
    %1 = vector.load %arg0[%c0_1, %c0_2] : memref<8x136xf32, #tpu.memory_space<vmem>>, vector<8x136xf32>
    %cst = arith.constant dense<0.000000e+00> : vector<8x136xf32>
    %2 = tpu.matmul %0, %1, %cst {dimension_numbers = #tpu.dot_dimension_numbers<[1], [0], [0], [1], [0, 0, 1, 1], [], []>} : vector<8x8xf32>, vector<8x136xf32>, vector<8x136xf32> -> vector<8x136xf32>
    %3 = arith.truncf %2 : vector<8x136xf32> to vector<8x136xbf16>
    %c0_3 = arith.constant 0 : index
    %c0_4 = arith.constant 0 : index
    %4 = vector.load %arg1[%c0_3, %c0_4] : memref<144x768xbf16, #tpu.memory_space<vmem>>, vector<136x768xbf16>
    %cst_5 = arith.constant dense<0.000000e+00> : vector<8x768xf32>
    %5 = tpu.matmul %3, %4, %cst_5 {dimension_numbers = #tpu.dot_dimension_numbers<[1], [0], [0], [1], [0, 0, 1, 1], [], []>} : vector<8x136xbf16>, vector<136x768xbf16>, vector<8x768xf32> -> vector<8x768xf32>
    %c0_6 = arith.constant 0 : index
    %c0_7 = arith.constant 0 : index
    %6 = vector.load %arg3[%c0_6, %c0_7] : memref<768x8xf32, #tpu.memory_space<vmem>>, vector<768x8xf32>
    %cst_8 = arith.constant dense<0.000000e+00> : vector<8x8xf32>
    %7 = tpu.matmul %5, %6, %cst_8 {dimension_numbers = #tpu.dot_dimension_numbers<[1], [0], [0], [1], [0, 0, 1, 1], [], []>} : vector<8x768xf32>, vector<768x8xf32>, vector<8x8xf32> -> vector<8x8xf32>
    %cst_9 = arith.constant dense<0.000000e+00> : vector<8xf32>
    %8 = vector.multi_reduction <add>, %7, %cst_9 [0] : vector<8x8xf32> to vector<8xf32>
    %9 = vector.shape_cast %8 : vector<8xf32> to vector<1x8xf32>
    %10 = arith.mulf %5, %5 : vector<8x768xf32>
    %cst_10 = arith.constant dense<0.000000e+00> : vector<8x8xf32>
    %11 = tpu.matmul %10, %6, %cst_10 {dimension_numbers = #tpu.dot_dimension_numbers<[1], [0], [0], [1], [0, 0, 1, 1], [], []>} : vector<8x768xf32>, vector<768x8xf32>, vector<8x8xf32> -> vector<8x8xf32>
    %cst_11 = arith.constant dense<0.000000e+00> : vector<8xf32>
    %12 = vector.multi_reduction <add>, %11, %cst_11 [0] : vector<8x8xf32> to vector<8xf32>
    %13 = vector.shape_cast %12 : vector<8xf32> to vector<1x8xf32>
    %cst_12 = arith.constant 4.8828125E-4 : f32
    %14 = vector.broadcast %cst_12 : f32 to vector<1x8xf32>
    %15 = arith.mulf %9, %14 : vector<1x8xf32>
    %cst_13 = arith.constant 4.8828125E-4 : f32
    %16 = vector.broadcast %cst_13 : f32 to vector<1x8xf32>
    %17 = arith.mulf %13, %16 : vector<1x8xf32>
    %18 = arith.mulf %15, %15 : vector<1x8xf32>
    %19 = arith.subf %17, %18 : vector<1x8xf32>
    %cst_14 = arith.constant 0.000000e+00 : f32
    %20 = vector.broadcast %cst_14 : f32 to vector<1x8xf32>
    %21 = arith.maximumf %19, %20 : vector<1x8xf32>
    %c8 = arith.constant 8 : index
    %c0_15 = arith.constant 0 : index
    %22 = vector.load %arg2[%c8, %c0_15] : memref<440x128xf32, #tpu.memory_space<vmem>>, vector<1x8xf32>
    %c9 = arith.constant 9 : index
    %c0_16 = arith.constant 0 : index
    %23 = vector.load %arg2[%c9, %c0_16] : memref<440x128xf32, #tpu.memory_space<vmem>>, vector<1x8xf32>
    %cst_17 = arith.constant 9.99999974E-6 : f32
    %24 = vector.broadcast %cst_17 : f32 to vector<1x8xf32>
    %25 = arith.addf %21, %24 : vector<1x8xf32>
    %26 = math.rsqrt %25 : vector<1x8xf32>
    %27 = arith.mulf %22, %26 : vector<1x8xf32>
    %28 = arith.mulf %15, %27 : vector<1x8xf32>
    %29 = arith.subf %23, %28 : vector<1x8xf32>
    %c136 = arith.constant 136 : index
    %c0_18 = arith.constant 0 : index
    %30 = vector.load %arg1[%c136, %c0_18] : memref<144x768xbf16, #tpu.memory_space<vmem>>, vector<8x384xbf16>
    %31 = arith.extf %30 : vector<8x384xbf16> to vector<8x384xf32>
    %32 = tpu.concatenate %27, %29 in 0 : vector<1x8xf32>, vector<1x8xf32> -> vector<2x8xf32>
    %cst_19 = arith.constant dense<0.000000e+00> : vector<2x384xf32>
    %33 = tpu.matmul %32, %31, %cst_19 {dimension_numbers = #tpu.dot_dimension_numbers<[1], [0], [0], [1], [0, 0, 1, 1], [], []>} : vector<2x8xf32>, vector<8x384xf32>, vector<2x384xf32> -> vector<2x384xf32>
    %34 = vector.extract_strided_slice %5 {offsets = [0, 0], sizes = [8, 128], strides = [1, 1]} : vector<8x768xf32> to vector<8x128xf32>
    %35 = vector.extract_strided_slice %33 {offsets = [0, 0], sizes = [1, 128], strides = [1, 1]} : vector<2x384xf32> to vector<1x128xf32>
    %36 = vector.broadcast %35 : vector<1x128xf32> to vector<8x128xf32>
    %37 = arith.mulf %34, %36 : vector<8x128xf32>
    %38 = vector.extract_strided_slice %33 {offsets = [1, 0], sizes = [1, 128], strides = [1, 1]} : vector<2x384xf32> to vector<1x128xf32>
    %39 = vector.broadcast %38 : vector<1x128xf32> to vector<8x128xf32>
    %40 = arith.addf %37, %39 : vector<8x128xf32>
    %41 = arith.mulf %40, %40 : vector<8x128xf32>
    %42 = vector.extract_strided_slice %41 {offsets = [0, 0], sizes = [4, 128], strides = [1, 1]} : vector<8x128xf32> to vector<4x128xf32>
    %c0_20 = arith.constant 0 : index
    %c0_21 = arith.constant 0 : index
    %43 = vector.load %arg5[%c0_20, %c0_21] : memref<12x256xf32, #tpu.memory_space<vmem>>, vector<4x128xf32>
    tpu.vector_store %arg5[%c0_20, %c0_21], %42 {strides = array<i32>} : memref<12x256xf32, #tpu.memory_space<vmem>>, vector<4x128xf32>,
    %44 = vector.extract_strided_slice %41 {offsets = [4, 0], sizes = [4, 128], strides = [1, 1]} : vector<8x128xf32> to vector<4x128xf32>
    %c0_22 = arith.constant 0 : index
    %c128 = arith.constant 128 : index
    %45 = vector.load %arg5[%c0_22, %c128] : memref<12x256xf32, #tpu.memory_space<vmem>>, vector<4x128xf32>
    tpu.vector_store %arg5[%c0_22, %c128], %44 {strides = array<i32>} : memref<12x256xf32, #tpu.memory_space<vmem>>, vector<4x128xf32>,
    %46 = vector.extract_strided_slice %5 {offsets = [0, 128], sizes = [8, 128], strides = [1, 1]} : vector<8x768xf32> to vector<8x128xf32>
    %47 = vector.extract_strided_slice %33 {offsets = [0, 128], sizes = [1, 128], strides = [1, 1]} : vector<2x384xf32> to vector<1x128xf32>
    %48 = vector.broadcast %47 : vector<1x128xf32> to vector<8x128xf32>
    %49 = arith.mulf %46, %48 : vector<8x128xf32>
    %50 = vector.extract_strided_slice %33 {offsets = [1, 128], sizes = [1, 128], strides = [1, 1]} : vector<2x384xf32> to vector<1x128xf32>
    %51 = vector.broadcast %50 : vector<1x128xf32> to vector<8x128xf32>
    %52 = arith.addf %49, %51 : vector<8x128xf32>
    %53 = arith.mulf %52, %52 : vector<8x128xf32>
    %54 = vector.extract_strided_slice %53 {offsets = [0, 0], sizes = [4, 128], strides = [1, 1]} : vector<8x128xf32> to vector<4x128xf32>
    %c4 = arith.constant 4 : index
    %c0_23 = arith.constant 0 : index
    %55 = vector.load %arg5[%c4, %c0_23] : memref<12x256xf32, #tpu.memory_space<vmem>>, vector<4x128xf32>
    tpu.vector_store %arg5[%c4, %c0_23], %54 {strides = array<i32>} : memref<12x256xf32, #tpu.memory_space<vmem>>, vector<4x128xf32>,
    %56 = vector.extract_strided_slice %53 {offsets = [4, 0], sizes = [4, 128], strides = [1, 1]} : vector<8x128xf32> to vector<4x128xf32>
    %c4_24 = arith.constant 4 : index
    %c128_25 = arith.constant 128 : index
    %57 = vector.load %arg5[%c4_24, %c128_25] : memref<12x256xf32, #tpu.memory_space<vmem>>, vector<4x128xf32>
    tpu.vector_store %arg5[%c4_24, %c128_25], %56 {strides = array<i32>} : memref<12x256xf32, #tpu.memory_space<vmem>>, vector<4x128xf32>,
    %58 = vector.extract_strided_slice %5 {offsets = [0, 256], sizes = [8, 128], strides = [1, 1]} : vector<8x768xf32> to vector<8x128xf32>
    %59 = vector.extract_strided_slice %33 {offsets = [0, 256], sizes = [1, 128], strides = [1, 1]} : vector<2x384xf32> to vector<1x128xf32>
    %60 = vector.broadcast %59 : vector<1x128xf32> to vector<8x128xf32>
    %61 = arith.mulf %58, %60 : vector<8x128xf32>
    %62 = vector.extract_strided_slice %33 {offsets = [1, 256], sizes = [1, 128], strides = [1, 1]} : vector<2x384xf32> to vector<1x128xf32>
    %63 = vector.broadcast %62 : vector<1x128xf32> to vector<8x128xf32>
    %64 = arith.addf %61, %63 : vector<8x128xf32>
    %65 = arith.mulf %64, %64 : vector<8x128xf32>
    %66 = vector.extract_strided_slice %65 {offsets = [0, 0], sizes = [4, 128], strides = [1, 1]} : vector<8x128xf32> to vector<4x128xf32>
    %c8_26 = arith.constant 8 : index
    %c0_27 = arith.constant 0 : index
    %67 = vector.load %arg5[%c8_26, %c0_27] : memref<12x256xf32, #tpu.memory_space<vmem>>, vector<4x128xf32>
    tpu.vector_store %arg5[%c8_26, %c0_27], %66 {strides = array<i32>} : memref<12x256xf32, #tpu.memory_space<vmem>>, vector<4x128xf32>,
    %68 = vector.extract_strided_slice %65 {offsets = [4, 0], sizes = [4, 128], strides = [1, 1]} : vector<8x128xf32> to vector<4x128xf32>
    %c8_28 = arith.constant 8 : index
    %c128_29 = arith.constant 128 : index
    %69 = vector.load %arg5[%c8_28, %c128_29] : memref<12x256xf32, #tpu.memory_space<vmem>>, vector<4x128xf32>
    tpu.vector_store %arg5[%c8_28, %c128_29], %68 {strides = array<i32>} : memref<12x256xf32, #tpu.memory_space<vmem>>, vector<4x128xf32>,
    %c0_30 = arith.constant 0 : index
    %c0_31 = arith.constant 0 : index
    %70 = vector.load %arg5[%c0_30, %c0_31] : memref<12x256xf32, #tpu.memory_space<vmem>>, vector<12x256xf32>
    %c16 = arith.constant 16 : index
    %c0_32 = arith.constant 0 : index
    %71 = vector.load %arg2[%c16, %c0_32] : memref<440x128xf32, #tpu.memory_space<vmem>>, vector<256x128xf32>
    %cst_33 = arith.constant dense<0.000000e+00> : vector<12x128xf32>
    %72 = tpu.matmul %70, %71, %cst_33 {dimension_numbers = #tpu.dot_dimension_numbers<[1], [0], [0], [1], [0, 0, 1, 1], [], []>} : vector<12x256xf32>, vector<256x128xf32>, vector<12x128xf32> -> vector<12x128xf32>
    %c400 = arith.constant 400 : index
    %c0_34 = arith.constant 0 : index
    %73 = vector.load %arg2[%c400, %c0_34] : memref<440x128xf32, #tpu.memory_space<vmem>>, vector<30x12xf32>
    %cst_35 = arith.constant dense<0.000000e+00> : vector<30x128xf32>
    %74 = tpu.matmul %73, %72, %cst_35 {dimension_numbers = #tpu.dot_dimension_numbers<[1], [0], [0], [1], [0, 0, 1, 1], [], []>} : vector<30x12xf32>, vector<12x128xf32>, vector<30x128xf32> -> vector<30x128xf32>
    %cst_36 = arith.constant dense<0xFF800000> : vector<128xf32>
    %75 = vector.multi_reduction <maximumf>, %74, %cst_36 [0] : vector<30x128xf32> to vector<128xf32>
    %76 = vector.shape_cast %75 : vector<128xf32> to vector<1x128xf32>
    %77 = vector.broadcast %76 : vector<1x128xf32> to vector<30x128xf32>
    %78 = arith.subf %74, %77 : vector<30x128xf32>
    %79 = math.exp %78 : vector<30x128xf32>
    %cst_37 = arith.constant dense<0.000000e+00> : vector<128xf32>
    %80 = vector.multi_reduction <add>, %79, %cst_37 [0] : vector<30x128xf32> to vector<128xf32>
    %81 = vector.shape_cast %80 : vector<128xf32> to vector<1x128xf32>
    %82 = math.log %81 : vector<1x128xf32>
    %83 = arith.addf %82, %76 : vector<1x128xf32>
    %84 = vector.broadcast %83 : vector<1x128xf32> to vector<30x128xf32>
    %85 = arith.subf %74, %84 : vector<30x128xf32>
    %cst_38 = arith.constant -3.000000e+00 : f32
    %86 = vector.broadcast %cst_38 : f32 to vector<30x128xf32>
    %87 = arith.mulf %86, %85 : vector<30x128xf32>
    %88 = math.exp %87 : vector<30x128xf32>
    %cst_39 = arith.constant 1.000000e+00 : f32
    %89 = vector.broadcast %cst_39 : f32 to vector<30x128xf32>
    %90 = arith.addf %89, %88 : vector<30x128xf32>
    %91 = tpu.reciprocal %90 {approx = true} : vector<30x128xf32> -> vector<30x128xf32>
    %c272 = arith.constant 272 : index
    %c0_40 = arith.constant 0 : index
    %92 = vector.load %arg2[%c272, %c0_40] : memref<440x128xf32, #tpu.memory_space<vmem>>, vector<128x128xf32>
    %cst_41 = arith.constant dense<0.000000e+00> : vector<30x128xf32>
    %93 = tpu.matmul %91, %92, %cst_41 {dimension_numbers = #tpu.dot_dimension_numbers<[1], [0], [0], [1], [0, 0, 1, 1], [], []>} : vector<30x128xf32>, vector<128x128xf32>, vector<30x128xf32> -> vector<30x128xf32>
    %94 = tpu.iota {dimensions = array<i32: 1>} : vector<30x128xi32>
    %c60_i32 = arith.constant 60 : i32
    %95 = vector.broadcast %c60_i32 : i32 to vector<30x128xi32>
    %96 = arith.cmpi slt, %94, %95 : vector<30x128xi32>
    %97 = arith.subf %91, %93 : vector<30x128xf32>
    %cst_42 = arith.constant 9.99999997E-7 : f32
    %98 = vector.broadcast %cst_42 : f32 to vector<30x128xf32>
    %99 = arith.addf %97, %98 : vector<30x128xf32>
    %100 = math.absf %99 : vector<30x128xf32>
    %cst_43 = arith.constant 0.000000e+00 : f32
    %101 = vector.broadcast %cst_43 : f32 to vector<30x128xf32>
    %102 = arith.select %96, %100, %101 : vector<30x128xi1>, vector<30x128xf32>
    %103 = vector.shape_cast %102 : vector<30x128xf32> to vector<1x30x128xf32>
    %cst_44 = arith.constant dense<0.000000e+00> : vector<1xf32>
    %104 = vector.multi_reduction <add>, %103, %cst_44 [1, 2] : vector<1x30x128xf32> to vector<1xf32>
    %105 = vector.shape_cast %104 : vector<1xf32> to vector<1x1x1xf32>
    %106 = vector.extract %105[0, 0, 0] : f32 from vector<1x1x1xf32>
    %cst_45 = arith.constant 5.55555569E-4 : f32
    %107 = arith.mulf %106, %cst_45 : f32
    %c432 = arith.constant 432 : index
    %c0_46 = arith.constant 0 : index
    %108 = vector.load %arg2[%c432, %c0_46] : memref<440x128xf32, #tpu.memory_space<vmem>>, vector<8x30xf32>
    %cst_47 = arith.constant dense<0.000000e+00> : vector<8x128xf32>
    %109 = tpu.matmul %108, %74, %cst_47 {dimension_numbers = #tpu.dot_dimension_numbers<[1], [0], [0], [1], [0, 0, 1, 1], [], []>} : vector<8x30xf32>, vector<30x128xf32>, vector<8x128xf32> -> vector<8x128xf32>
    %110 = vector.extract_strided_slice %109 {offsets = [0, 0], sizes = [4, 128], strides = [1, 1]} : vector<8x128xf32> to vector<4x128xf32>
    %cst_48 = arith.constant dense<0xFF800000> : vector<128xf32>
    %111 = vector.multi_reduction <maximumf>, %110, %cst_48 [0] : vector<4x128xf32> to vector<128xf32>
    %112 = vector.shape_cast %111 : vector<128xf32> to vector<1x128xf32>
    %113 = vector.broadcast %112 : vector<1x128xf32> to vector<4x128xf32>
    %114 = arith.subf %110, %113 : vector<4x128xf32>
    %115 = math.exp %114 : vector<4x128xf32>
    %cst_49 = arith.constant dense<0.000000e+00> : vector<128xf32>
    %116 = vector.multi_reduction <add>, %115, %cst_49 [0] : vector<4x128xf32> to vector<128xf32>
    %117 = vector.shape_cast %116 : vector<128xf32> to vector<1x128xf32>
    %118 = math.log %117 : vector<1x128xf32>
    %119 = arith.addf %118, %112 : vector<1x128xf32>
    %120 = vector.broadcast %119 : vector<1x128xf32> to vector<8x128xf32>
    %121 = arith.subf %109, %120 : vector<8x128xf32>
    %122 = tpu.iota {dimensions = array<i32: 0>} : vector<8x128xi32>
    %123 = tpu.iota {dimensions = array<i32: 1>} : vector<8x128xi32>
    %c4_i32 = arith.constant 4 : i32
    %124 = vector.broadcast %c4_i32 : i32 to vector<8x128xi32>
    %125 = arith.cmpi eq, %122, %124 : vector<8x128xi32>
    %c0_i32 = arith.constant 0 : i32
    %126 = vector.broadcast %c0_i32 : i32 to vector<8x128xi32>
    %127 = arith.cmpi eq, %123, %126 : vector<8x128xi32>
    %128 = arith.andi %125, %127 : vector<8x128xi1>
    %129 = vector.broadcast %107 : f32 to vector<8x128xf32>
    %130 = arith.select %128, %129, %121 : vector<8x128xi1>, vector<8x128xf32>
    %c0_50 = arith.constant 0 : index
    %c0_51 = arith.constant 0 : index
    %131 = vector.load %arg4[%c0_50, %c0_51] : memref<8x128xf32, #tpu.memory_space<vmem>>, vector<8x128xf32>
    tpu.vector_store %arg4[%c0_50, %c0_51], %130 {strides = array<i32>} : memref<8x128xf32, #tpu.memory_space<vmem>>, vector<8x128xf32>,
    return
  }
}

</mosaic_0001>

<llo_original>
// kernel: squeeze.2
$region0: #{squeeze.2}
  %s0 = inlined_call_operand.vmem [shape: f32[2,4,136], index: 0, kind: input, shape index: {}]
  %s1 = inlined_call_operand.vmem [shape: f32[8,136], index: 1, kind: output, shape index: {}]
  $region1: #{squeeze.2} parent=0
    #allocation0 [shape = 'u8[16384]{0}', space=vmem, size = 0x4000, scoped, tag = 'scoped mem for input reshape']
    %s3 = sshllo.u32 0, 4
    %s4 = smul.addr 4, 3
    %s5 = scalar_lea.vmem %s0, %s4
    %v6 = vld [vmem:[%s5] sm:%s3]
    %s7 = scalar_lea.vmem [#allocation0], 24
    %8 = vst [vmem:[%s7] sm:%s3] %v6
    %s9 = smul.addr 4, 2
    %s10 = scalar_lea.vmem %s0, %s9
    %v11 = vld [vmem:[%s10] sm:%s3]
    %s12 = scalar_lea.vmem [#allocation0], 16
    %13 = vst [vmem:[%s12] sm:%s3] %v11
    %s14 = scalar_lea.vmem %s0, 4
    %v15 = vld [vmem:[%s14] sm:%s3]
    %s16 = scalar_lea.vmem [#allocation0], 8
    %17 = vst [vmem:[%s16] sm:%s3] %v15
    %v18 = vld [vmem:[%s0] sm:%s3]
    %19 = vst [vmem:[#allocation0] sm:%s3] %v18
    %s20 = scalar_lea.vmem [#allocation0], 8
    %v21 = vld [vmem:[%s20] sm:$0xf]
    %vm22 = vcmask 64512
    %s23 = scalar_lea.vmem %s1, 8
    %24 = vst.msk [vmem:[%s23] sm:$0xf] %vm22, %v21
    %s25 = scalar_lea.vmem [#allocation0], 24
    %v26 = vld [vmem:[%s25] sm:$0xf]
    %vm27 = vcmask 64512
    %s28 = scalar_lea.vmem %s1, 12
    %29 = vst.msk [vmem:[%s28] sm:$0xf] %vm27, %v26
    %v30 = vld [vmem:[#allocation0] sm:$0xf]
    %31 = vst [vmem:[%s1] sm:$0xf] %v30
    %s32 = scalar_lea.vmem [#allocation0], 16
    %v33 = vld [vmem:[%s32] sm:$0xf]
    %s34 = scalar_lea.vmem %s1, 4
    %35 = vst [vmem:[%s34] sm:$0xf] %v33

// kernel: itnet_forward.1
$region0: #{itnet_forward.1}
  #allocation0 [shape = 'u32[]', space=smem, size = 0x4, offset = 0x4, fixed_abs, tag = 'smem constant byte address 0x4 - core index']
  #allocation1 [shape = 'u32[144,128]{1,0:T(1,128)}', space=vmem, size = 0x12000, scoped, tag = 'internal scratch']
  #allocation2 [shape = 'f32[12,256]{1,0:T(8,128)}', space=vmem, size = 0x4000, scoped, tag = 'scratch operand']
  %s0 = inlined_call_operand.vmem [shape: f32[8,136], index: 0, kind: input, shape index: {}]
  %s1 = inlined_call_operand.vmem [shape: bf16[144,768], index: 1, kind: input, shape index: {}]
  %s2 = inlined_call_operand.vmem [shape: f32[440,128], index: 2, kind: input, shape index: {}]
  %s3 = inlined_call_operand.vmem [shape: f32[768,8], index: 3, kind: input, shape index: {}]
  %s4 = inlined_call_operand.vmem [shape: f32[8,128], index: 4, kind: output, shape index: {}]
  %s5 = sld [smem:[#allocation0]]
  $region26: #{itnet_forward.1} parent=0
    _
  %s7 = ssub.s32 1, %s5
  %s8 = scalar_select 0, %s7, %s5
  // Predicated region
  $region2: #{itnet_forward.1} parent=0 // pred_check
    _
  $region3: #{itnet_forward.1} parent=0 // pred_check_branch
    %10 = sbr.rel (0) target = $region5
  $region4: #{itnet_forward.1} parent=0 // pred_region
    _
  $region5: #{itnet_forward.1} parent=0 // pred_fallthru
    _
  // Predicated region
  $region6: #{itnet_forward.1} parent=0 // pred_check
    _
  $region7: #{itnet_forward.1} parent=0 // pred_check_branch
    %12 = sbr.rel (0) target = $region9
  $region8: #{itnet_forward.1} parent=0 // pred_region
    _
  $region9: #{itnet_forward.1} parent=0 // pred_fallthru
    _
  // Predicated region
  $region10: #{itnet_forward.1} parent=0 // pred_check
    _
  $region11: #{itnet_forward.1} parent=0 // pred_check_branch
    %14 = sbr.rel (0) target = $region13
  $region12: #{itnet_forward.1} parent=0 // pred_region
    _
  $region13: #{itnet_forward.1} parent=0 // pred_fallthru
    _
  // Predicated region
  $region14: #{itnet_forward.1} parent=0 // pred_check
    _
  $region15: #{itnet_forward.1} parent=0 // pred_check_branch
    %16 = sbr.rel (0) target = $region17
  $region16: #{itnet_forward.1} parent=0 // pred_region
    _
  $region17: #{itnet_forward.1} parent=0 // pred_fallthru
    _
  %v18 = vld [vmem:[%s2] sm:$0xff]
  %v19 = vld [vmem:[%s0] sm:$0xff]
  %v20 = vld [vmem:[%s0 + $0x8] sm:$0xff]
  %vm21 = vcmask 64512
  %v23 = vsel %vm21, %v18, 0
  %25 = vmatprep.subr.mxu0 %v20
  %26 = vmatpush1.msra.mxu0 %v19
  %27 = vmatprep.subr.mxu0 0.0
  %28 = vmatpush1.msra.mxu0 0.0
  %29 = vmatprep.subr.mxu0 0.0
  %30 = vmatpush1.msra.mxu0 0.0
  %31 = vmatprep.subr.mxu0 0.0
  %32 = vmatpush1.msra.mxu0 0.0
  %33 = vmatprep.subr.mxu0 0.0
  %34 = vmatpush1.msra.mxu0 0.0
  %35 = vmatprep.subr.mxu0 0.0
  %36 = vmatpush1.msra.mxu0 0.0
  %37 = vmatprep.subr.mxu0 0.0
  %38 = vmatpush1.msra.mxu0 0.0
  %39 = vmatprep.subr.mxu0 0.0
  %40 = vmatpush1.msra.mxu0 0.0
  %41 = vmatprep.subr.mxu0 0.0
  %42 = vmatpush1.msra.mxu0 0.0
  %43 = vmatprep.subr.mxu0 0.0
  %44 = vmatpush1.msra.mxu0 0.0
  %45 = vmatprep.subr.mxu0 0.0
  %46 = vmatpush1.msra.mxu0 0.0
  %47 = vmatprep.subr.mxu0 0.0
  %48 = vmatpush1.msra.mxu0 0.0
  %49 = vmatprep.subr.mxu0 0.0
  %50 = vmatpush1.msra.mxu0 0.0
  %51 = vmatprep.subr.mxu0 0.0
  %52 = vmatpush1.msra.mxu0 0.0
  %53 = vmatprep.subr.mxu0 0.0
  %54 = vmatpush1.msra.mxu0 0.0
  %55 = vmatprep.subr.mxu0 0.0
  %56 = vmatpush1.msra.mxu0 0.0
  %57 = vmatprep.subr.mxu0 0.0
  %58 = vmatpush1.msra.mxu0 0.0
  %59 = vmatprep.subr.mxu0 0.0
  %60 = vmatpush1.msra.mxu0 0.0
  %61 = vmatprep.subr.mxu0 0.0
  %62 = vmatpush1.msra.mxu0 0.0
  %63 = vmatprep.subr.mxu0 0.0
  %64 = vmatpush1.msra.mxu0 0.0
  %65 = vmatprep.subr.mxu0 0.0
  %66 = vmatpush1.msra.mxu0 0.0
  %67 = vmatprep.subr.mxu0 0.0
  %68 = vmatpush1.msra.mxu0 0.0
  %69 = vmatprep.subr.mxu0 0.0
  %70 = vmatpush1.msra.mxu0 0.0
  %71 = vmatprep.subr.mxu0 0.0
  %72 = vmatpush1.msra.mxu0 0.0
  %73 = vmatprep.subr.mxu0 0.0
  %74 = vmatpush1.msra.mxu0 0.0
  %75 = vmatprep.subr.mxu0 0.0
  %76 = vmatpush1.msra.mxu0 0.0
  %77 = vmatprep.subr.mxu0 0.0
  %78 = vmatpush1.msra.mxu0 0.0
  %79 = vmatprep.subr.mxu0 0.0
  %80 = vmatpush1.msra.mxu0 0.0
  %81 = vmatprep.subr.mxu0 0.0
  %82 = vmatpush1.msra.mxu0 0.0
  %83 = vmatprep.subr.mxu0 0.0
  %84 = vmatpush1.msra.mxu0 0.0
  %85 = vmatprep.subr.mxu0 0.0
  %86 = vmatpush1.msra.mxu0 0.0
  %87 = vmatprep.subr.mxu0 0.0
  %88 = vmatpush1.msra.mxu0 0.0
  %89 = vmatprep.mubr.f32.mxu0 0.0
  %90 = vmatmul.mubr.f32.gmra.mrb[0].mxu0 %v23
  %v91 = vpop.f32.mrb[0].mxu0
  %v92 = vadd.f32 0.0, %v91
  %v93 = vpop.f32.mrb[0].mxu0
  %v94 = vadd.f32 0.0, %v93
  %95 = vdwg.mxu0
  %v96 = vpack.c.bf16 %v92, %v92
  %v97 = vpack.c.bf16 %v94, %v94
  %v98 = vld [vmem:[%s1] sm:$0xff]
  %v99 = vld [vmem:[%s1 + $0x8] sm:$0xff]
  %v100 = vld [vmem:[%s1 + $0x10] sm:$0xff]
  %v101 = vld [vmem:[%s1 + $0x18] sm:$0xff]
  %v102 = vld [vmem:[%s1 + $0x20] sm:$0xff]
  %v103 = vld [vmem:[%s1 + $0x28] sm:$0xff]
  %v104 = vld [vmem:[%s1 + $0x30] sm:$0xff]
  %v105 = vld [vmem:[%s1 + $0x38] sm:$0xff]
  %v106 = vld [vmem:[%s1 + $0x40] sm:$0xff]
  %v107 = vld [vmem:[%s1 + $0x48] sm:$0xff]
  %v108 = vld [vmem:[%s1 + $0x50] sm:$0xff]
  %v109 = vld [vmem:[%s1 + $0x58] sm:$0xff]
  %v110 = vld [vmem:[%s1 + $0x60] sm:$0xff]
  %v111 = vld [vmem:[%s1 + $0x68] sm:$0xff]
  %v112 = vld [vmem:[%s1 + $0x70] sm:$0xff]
  %v113 = vld [vmem:[%s1 + $0x78] sm:$0xff]
  %v114 = vld [vmem:[%s1 + $0x80] sm:$0xff]
  %v115 = vld [vmem:[%s1 + $0x88] sm:$0xff]
  %v116 = vld [vmem:[%s1 + $0x90] sm:$0xff]
  %v117 = vld [vmem:[%s1 + $0x98] sm:$0xff]
  %v118 = vld [vmem:[%s1 + $0xa0] sm:$0xff]
  %v119 = vld [vmem:[%s1 + $0xa8] sm:$0xff]
  %v120 = vld [vmem:[%s1 + $0xb0] sm:$0xff]
  %v121 = vld [vmem:[%s1 + $0xb8] sm:$0xff]
  %v122 = vld [vmem:[%s1 + $0xc0] sm:$0xff]
  %v123 = vld [vmem:[%s1 + $0xc8] sm:$0xff]
  %v124 = vld [vmem:[%s1 + $0xd0] sm:$0xff]
  %v125 = vld [vmem:[%s1 + $0xd8] sm:$0xff]
  %v126 = vld [vmem:[%s1 + $0xe0] sm:$0xff]
  %v127 = vld [vmem:[%s1 + $0xe8] sm:$0xff]
  %v128 = vld [vmem:[%s1 + $0xf0] sm:$0xff]
  %v129 = vld [vmem:[%s1 + $0xf8] sm:$0xff]
  %v130 = vld [vmem:[%s1 + $0x100] sm:$0xff]
  %v131 = vld [vmem:[%s1 + $0x108] sm:$0xff]
  %v132 = vld [vmem:[%s1 + $0x110] sm:$0xff]
  %v133 = vld [vmem:[%s1 + $0x118] sm:$0xff]
  %v134 = vld [vmem:[%s1 + $0x120] sm:$0xff]
  %v135 = vld [vmem:[%s1 + $0x128] sm:$0xff]
  %v136 = vld [vmem:[%s1 + $0x130] sm:$0xff]
  %v137 = vld [vmem:[%s1 + $0x138] sm:$0xff]
  %v138 = vld [vmem:[%s1 + $0x140] sm:$0xff]
  %v139 = vld [vmem:[%s1 + $0x148] sm:$0xff]
  %v140 = vld [vmem:[%s1 + $0x150] sm:$0xff]
  %v141 = vld [vmem:[%s1 + $0x158] sm:$0xff]
  %v142 = vld [vmem:[%s1 + $0x160] sm:$0xff]
  %v143 = vld [vmem:[%s1 + $0x168] sm:$0xff]
  %v144 = vld [vmem:[%s1 + $0x170] sm:$0xff]
  %v145 = vld [vmem:[%s1 + $0x178] sm:$0xff]
  %v146 = vld [vmem:[%s1 + $0x180] sm:$0xff]
  %v147 = vld [vmem:[%s1 + $0x188] sm:$0xff]
  %v148 = vld [vmem:[%s1 + $0x190] sm:$0xff]
  %v200 = vunpack.c.l.b16 %v98
  %v201 = vunpack.c.h.b16 %v98
  %v202 = vunpack.c.l.b16 %v99
  %v203 = vunpack.c.h.b16 %v99
  %v204 = vunpack.c.l.b16 %v100
  %v205 = vunpack.c.h.b16 %v100
  %v206 = vunpack.c.l.b16 %v101
  %v207 = vunpack.c.h.b16 %v101
  %v208 = vunpack.c.l.b16 %v102
  %v209 = vunpack.c.h.b16 %v102
  %v210 = vunpack.c.l.b16 %v103
  %v211 = vunpack.c.h.b16 %v103
  %v212 = vunpack.c.l.b16 %v104
  %v213 = vunpack.c.h.b16 %v104
  %v214 = vunpack.c.l.b16 %v105
  %v215 = vunpack.c.h.b16 %v105
  %v216 = vunpack.c.l.b16 %v106
  %v217 = vunpack.c.h.b16 %v106
  %v218 = vunpack.c.l.b16 %v107
  %v219 = vunpack.c.h.b16 %v107
  %v220 = vunpack.c.l.b16 %v108
  %v221 = vunpack.c.h.b16 %v108
  %v222 = vunpack.c.l.b16 %v109
  %v223 = vunpack.c.h.b16 %v109
  %v224 = vunpack.c.l.b16 %v110
  %v225 = vunpack.c.h.b16 %v110
  %v226 = vunpack.c.l.b16 %v111
  %v227 = vunpack.c.h.b16 %v111
  %v228 = vunpack.c.l.b16 %v112
  %v229 = vunpack.c.h.b16 %v112
  %v230 = vunpack.c.l.b16 %v113
  %v231 = vunpack.c.h.b16 %v113
  %v232 = vunpack.c.l.b16 %v114
  %v233 = vunpack.c.h.b16 %v114
  %v234 = vunpack.c.l.b16 %v115
  %v235 = vunpack.c.h.b16 %v115
  %v236 = vunpack.c.l.b16 %v116
  %v237 = vunpack.c.h.b16 %v116
  %v238 = vunpack.c.l.b16 %v117
  %v239 = vunpack.c.h.b16 %v117
  %v240 = vunpack.c.l.b16 %v118
  %v241 = vunpack.c.h.b16 %v118
  %v242 = vunpack.c.l.b16 %v119
  %v243 = vunpack.c.h.b16 %v119
  %v244 = vunpack.c.l.b16 %v120
  %v245 = vunpack.c.h.b16 %v120
  %v246 = vunpack.c.l.b16 %v121
  %v247 = vunpack.c.h.b16 %v121
  %v248 = vunpack.c.l.b16 %v122
  %v249 = vunpack.c.h.b16 %v122
  %v250 = vunpack.c.l.b16 %v123
  %v251 = vunpack.c.h.b16 %v123
  %v252 = vunpack.c.l.b16 %v124
  %v253 = vunpack.c.h.b16 %v124
  %v254 = vunpack.c.l.b16 %v125
  %v255 = vunpack.c.h.b16 %v125
  %v256 = vunpack.c.l.b16 %v126
  %v257 = vunpack.c.h.b16 %v126
  %v258 = vunpack.c.l.b16 %v127
  %v259 = vunpack.c.h.b16 %v127
  %v260 = vunpack.c.l.b16 %v128
  %v261 = vunpack.c.h.b16 %v128
  %v262 = vunpack.c.l.b16 %v129
  %v263 = vunpack.c.h.b16 %v129
  %v264 = vunpack.c.l.b16 %v130
  %v265 = vunpack.c.h.b16 %v130
  %v266 = vunpack.c.l.b16 %v131
  %v267 = vunpack.c.h.b16 %v131
  %v268 = vunpack.c.l.b16 %v132
  %v269 = vunpack.c.h.b16 %v132
  %v270 = vunpack.c.l.b16 %v133
  %v271 = vunpack.c.h.b16 %v133
  %v272 = vunpack.c.l.b16 %v134
  %v273 = vunpack.c.h.b16 %v134
  %v274 = vunpack.c.l.b16 %v135
  %v275 = vunpack.c.h.b16 %v135
  %v276 = vunpack.c.l.b16 %v136
  %v277 = vunpack.c.h.b16 %v136
  %v278 = vunpack.c.l.b16 %v137
  %v279 = vunpack.c.h.b16 %v137
  %v280 = vunpack.c.l.b16 %v138
  %v281 = vunpack.c.h.b16 %v138
  %v282 = vunpack.c.l.b16 %v139
  %v283 = vunpack.c.h.b16 %v139
  %v284 = vunpack.c.l.b16 %v140
  %v285 = vunpack.c.h.b16 %v140
  %v286 = vunpack.c.l.b16 %v141
  %v287 = vunpack.c.h.b16 %v141
  %v288 = vunpack.c.l.b16 %v142
  %v289 = vunpack.c.h.b16 %v142
  %v290 = vunpack.c.l.b16 %v143
  %v291 = vunpack.c.h.b16 %v143
  %v292 = vunpack.c.l.b16 %v144
  %v293 = vunpack.c.h.b16 %v144
  %v294 = vunpack.c.l.b16 %v145
  %v295 = vunpack.c.h.b16 %v145
  %v296 = vunpack.c.l.b16 %v146
  %v297 = vunpack.c.h.b16 %v146
  %v298 = vunpack.c.l.b16 %v147
  %v299 = vunpack.c.h.b16 %v147
  %v300 = vunpack.c.l.b16 %v148
  %v301 = vunpack.c.h.b16 %v148
  %v302 = vpack.c.b16 %v206, %v200
  %v303 = vpack.c.b16 %v207, %v201
  %v304 = vpack.c.b16 %v208, %v202
  %v305 = vpack.c.b16 %v209, %v203
  %v306 = vpack.c.b16 %v210, %v204
  %v307 = vpack.c.b16 %v211, %v205
  %v308 = vpack.c.b16 %v218, %v212
  %v309 = vpack.c.b16 %v219, %v213
  %v310 = vpack.c.b16 %v220, %v214
  %v311 = vpack.c.b16 %v221, %v215
  %v312 = vpack.c.b16 %v222, %v216
  %v313 = vpack.c.b16 %v223, %v217
  %v314 = vpack.c.b16 %v230, %v224
  %v315 = vpack.c.b16 %v231, %v225
  %v316 = vpack.c.b16 %v232, %v226
  %v317 = vpack.c.b16 %v233, %v227
  %v318 = vpack.c.b16 %v234, %v228
  %v319 = vpack.c.b16 %v235, %v229
  %v320 = vpack.c.b16 %v242, %v236
  %v321 = vpack.c.b16 %v243, %v237
  %v322 = vpack.c.b16 %v244, %v238
  %v323 = vpack.c.b16 %v245, %v239
  %v324 = vpack.c.b16 %v246, %v240
  %v325 = vpack.c.b16 %v247, %v241
  %v326 = vpack.c.b16 %v254, %v248
  %v327 = vpack.c.b16 %v255, %v249
  %v328 = vpack.c.b16 %v256, %v250
  %v329 = vpack.c.b16 %v257, %v251
  %v330 = vpack.c.b16 %v258, %v252
  %v331 = vpack.c.b16 %v259, %v253
  %v332 = vpack.c.b16 %v266, %v260
  %v333 = vpack.c.b16 %v267, %v261
  %v334 = vpack.c.b16 %v268, %v262
  %v335 = vpack.c.b16 %v269, %v263
  %v336 = vpack.c.b16 %v270, %v264
  %v337 = vpack.c.b16 %v271, %v265
  %v338 = vpack.c.b16 %v278, %v272
  %v339 = vpack.c.b16 %v279, %v273
  %v340 = vpack.c.b16 %v280, %v274
  %v341 = vpack.c.b16 %v281, %v275
  %v342 = vpack.c.b16 %v282, %v276
  %v343 = vpack.c.b16 %v283, %v277
  %v344 = vpack.c.b16 %v290, %v284
  %v345 = vpack.c.b16 %v291, %v285
  %v346 = vpack.c.b16 %v292, %v286
  %v347 = vpack.c.b16 %v293, %v287
  %v348 = vpack.c.b16 %v294, %v288
  %v349 = vpack.c.b16 %v295, %v289
  %v350 = vpack.c.b16 %v296, %v296
  %v351 = vpack.c.b16 %v297, %v297
  %v352 = vpack.c.b16 %v298, %v298
  %v353 = vpack.c.b16 %v299, %v299
  %v354 = vpack.c.b16 %v300, %v300
  %v355 = vpack.c.b16 %v301, %v301
  %v405 = vsel %vm21, %v97, 0
  %vm407 = vcmask 1043456
  %v409 = vsel %vm407, %v350, 0
  %v412 = vsel %vm407, %v351, 0
  %v415 = vsel %vm407, %v352, 0
  %v418 = vsel %vm407, %v353, 0
  %v421 = vsel %vm407, %v354, 0
  %v424 = vsel %vm407, %v355, 0
  %426 = vmatprep.subr.bf16.mxu0 %v303
  %427 = vmatpush1.bf16.msra.mxu0 %v302
  %428 = vmatprep.subr.bf16.mxu0 %v309
  %429 = vmatpush1.bf16.msra.mxu0 %v308
  %430 = vmatprep.subr.bf16.mxu0 %v315
  %431 = vmatpush1.bf16.msra.mxu0 %v314
  %432 = vmatprep.subr.bf16.mxu0 %v321
  %433 = vmatpush1.bf16.msra.mxu0 %v320
  %434 = vmatprep.subr.bf16.mxu0 %v327
  %435 = vmatpush1.bf16.msra.mxu0 %v326
  %436 = vmatprep.subr.bf16.mxu0 %v333
  %437 = vmatpush1.bf16.msra.mxu0 %v332
  %438 = vmatprep.subr.bf16.mxu0 %v339
  %439 = vmatpush1.bf16.msra.mxu0 %v338
  %440 = vmatprep.subr.bf16.mxu0 %v345
  %441 = vmatpush1.bf16.msra.mxu0 %v344
  %442 = vmatprep.subr.bf16.mxu0 %v412
  %443 = vmatpush1.bf16.msra.mxu0 %v409
  %444 = vmatprep.subr.bf16.mxu0 0
  %445 = vmatpush1.bf16.msra.mxu0 0
  %446 = vmatprep.subr.bf16.mxu0 0
  %447 = vmatpush1.bf16.msra.mxu0 0
  %448 = vmatprep.subr.bf16.mxu0 0
  %449 = vmatpush1.bf16.msra.mxu0 0
  %450 = vmatprep.subr.bf16.mxu0 0
  %451 = vmatpush1.bf16.msra.mxu0 0
  %452 = vmatprep.subr.bf16.mxu0 0
  %453 = vmatpush1.bf16.msra.mxu0 0
  %454 = vmatprep.subr.bf16.mxu0 0
  %455 = vmatpush1.bf16.msra.mxu0 0
  %456 = vmatprep.subr.bf16.mxu0 0
  %457 = vmatpush1.bf16.msra.mxu0 0
  %458 = vmatprep.mubr.bf16.mxu0 %v405
  %459 = vmatmul.mubr.bf16.gmra.mrb[0].mxu0 %v96
  %v460 = vpop.f32.mrb[0].mxu0
  %v461 = vadd.f32 0.0, %v460
  %v462 = vpop.f32.mrb[0].mxu0
  %v463 = vadd.f32 0.0, %v462
  %v464 = vpop.f32.mrb[0].mxu0
  %v465 = vpop.f32.mrb[0].mxu0
  %466 = vdwg.mxu0
  %467 = vmatprep.subr.bf16.mxu0 %v305
  %468 = vmatpush1.bf16.msra.mxu0 %v304
  %469 = vmatprep.subr.bf16.mxu0 %v311
  %470 = vmatpush1.bf16.msra.mxu0 %v310
  %471 = vmatprep.subr.bf16.mxu0 %v317
  %472 = vmatpush1.bf16.msra.mxu0 %v316
  %473 = vmatprep.subr.bf16.mxu0 %v323
  %474 = vmatpush1.bf16.msra.mxu0 %v322
  %475 = vmatprep.subr.bf16.mxu0 %v329
  %476 = vmatpush1.bf16.msra.mxu0 %v328
  %477 = vmatprep.subr.bf16.mxu0 %v335
  %478 = vmatpush1.bf16.msra.mxu0 %v334
  %479 = vmatprep.subr.bf16.mxu0 %v341
  %480 = vmatpush1.bf16.msra.mxu0 %v340
  %481 = vmatprep.subr.bf16.mxu0 %v347
  %482 = vmatpush1.bf16.msra.mxu0 %v346
  %483 = vmatprep.subr.bf16.mxu0 %v418
  %484 = vmatpush1.bf16.msra.mxu0 %v415
  %485 = vmatprep.subr.bf16.mxu0 0
  %486 = vmatpush1.bf16.msra.mxu0 0
  %487 = vmatprep.subr.bf16.mxu0 0
  %488 = vmatpush1.bf16.msra.mxu0 0
  %489 = vmatprep.subr.bf16.mxu0 0
  %490 = vmatpush1.bf16.msra.mxu0 0
  %491 = vmatprep.subr.bf16.mxu0 0
  %492 = vmatpush1.bf16.msra.mxu0 0
  %493 = vmatprep.subr.bf16.mxu0 0
  %494 = vmatpush1.bf16.msra.mxu0 0
  %495 = vmatprep.subr.bf16.mxu0 0
  %496 = vmatpush1.bf16.msra.mxu0 0
  %497 = vmatprep.subr.bf16.mxu0 0
  %498 = vmatpush1.bf16.msra.mxu0 0
  %499 = vmatprep.mubr.bf16.mxu0 %v405
  %500 = vmatmul.mubr.bf16.gmra.mrb[0].mxu0 %v96
  %v501 = vpop.f32.mrb[0].mxu0
  %v502 = vadd.f32 0.0, %v501
  %v503 = vpop.f32.mrb[0].mxu0
  %v504 = vadd.f32 0.0, %v503
  %v505 = vpop.f32.mrb[0].mxu0
  %v506 = vpop.f32.mrb[0].mxu0
  %507 = vdwg.mxu0
  %508 = vmatprep.subr.bf16.mxu0 %v307
  %509 = vmatpush1.bf16.msra.mxu0 %v306
  %510 = vmatprep.subr.bf16.mxu0 %v313
  %511 = vmatpush1.bf16.msra.mxu0 %v312
  %512 = vmatprep.subr.bf16.mxu0 %v319
  %513 = vmatpush1.bf16.msra.mxu0 %v318
  %514 = vmatprep.subr.bf16.mxu0 %v325
  %515 = vmatpush1.bf16.msra.mxu0 %v324
  %516 = vmatprep.subr.bf16.mxu0 %v331
  %517 = vmatpush1.bf16.msra.mxu0 %v330
  %518 = vmatprep.subr.bf16.mxu0 %v337
  %519 = vmatpush1.bf16.msra.mxu0 %v336
  %520 = vmatprep.subr.bf16.mxu0 %v343
  %521 = vmatpush1.bf16.msra.mxu0 %v342
  %522 = vmatprep.subr.bf16.mxu0 %v349
  %523 = vmatpush1.bf16.msra.mxu0 %v348
  %524 = vmatprep.subr.bf16.mxu0 %v424
  %525 = vmatpush1.bf16.msra.mxu0 %v421
  %526 = vmatprep.subr.bf16.mxu0 0
  %527 = vmatpush1.bf16.msra.mxu0 0
  %528 = vmatprep.subr.bf16.mxu0 0
  %529 = vmatpush1.bf16.msra.mxu0 0
  %530 = vmatprep.subr.bf16.mxu0 0
  %531 = vmatpush1.bf16.msra.mxu0 0
  %532 = vmatprep.subr.bf16.mxu0 0
  %533 = vmatpush1.bf16.msra.mxu0 0
  %534 = vmatprep.subr.bf16.mxu0 0
  %535 = vmatpush1.bf16.msra.mxu0 0
  %536 = vmatprep.subr.bf16.mxu0 0
  %537 = vmatpush1.bf16.msra.mxu0 0
  %538 = vmatprep.subr.bf16.mxu0 0
  %539 = vmatpush1.bf16.msra.mxu0 0
  %540 = vmatprep.mubr.bf16.mxu0 %v405
  %541 = vmatmul.mubr.bf16.gmra.mrb[0].mxu0 %v96
  %v542 = vpop.f32.mrb[0].mxu0
  %v543 = vadd.f32 0.0, %v542
  %v544 = vpop.f32.mrb[0].mxu0
  %v545 = vadd.f32 0.0, %v544
  %v546 = vpop.f32.mrb[0].mxu0
  %v547 = vpop.f32.mrb[0].mxu0
  %548 = vdwg.mxu0
  %v549 = vld [vmem:[%s3] sm:$0xff]
  %v550 = vld [vmem:[%s3 + $0x8] sm:$0xff]
  %v551 = vld [vmem:[%s3 + $0x10] sm:$0xff]
  %v552 = vld [vmem:[%s3 + $0x18] sm:$0xff]
  %v553 = vld [vmem:[%s3 + $0x20] sm:$0xff]
  %v554 = vld [vmem:[%s3 + $0x28] sm:$0xff]
  %v555 = vld [vmem:[%s3 + $0x30] sm:$0xff]
  %v556 = vld [vmem:[%s3 + $0x38] sm:$0xff]
  %v557 = vld [vmem:[%s3 + $0x40] sm:$0xff]
  %v558 = vld [vmem:[%s3 + $0x48] sm:$0xff]
  %v559 = vld [vmem:[%s3 + $0x50] sm:$0xff]
  %v560 = vld [vmem:[%s3 + $0x58] sm:$0xff]
  %v561 = vld [vmem:[%s3 + $0x60] sm:$0xff]
  %v562 = vld [vmem:[%s3 + $0x68] sm:$0xff]
  %v563 = vld [vmem:[%s3 + $0x70] sm:$0xff]
  %v564 = vld [vmem:[%s3 + $0x78] sm:$0xff]
  %v565 = vld [vmem:[%s3 + $0x80] sm:$0xff]
  %v566 = vld [vmem:[%s3 + $0x88] sm:$0xff]
  %v567 = vld [vmem:[%s3 + $0x90] sm:$0xff]
  %v568 = vld [vmem:[%s3 + $0x98] sm:$0xff]
  %v569 = vld [vmem:[%s3 + $0xa0] sm:$0xff]
  %v570 = vld [vmem:[%s3 + $0xa8] sm:$0xff]
  %v571 = vld [vmem:[%s3 + $0xb0] sm:$0xff]
  %v572 = vld [vmem:[%s3 + $0xb8] sm:$0xff]
  %v573 = vld [vmem:[%s3 + $0xc0] sm:$0xff]
  %v574 = vld [vmem:[%s3 + $0xc8] sm:$0xff]
  %v575 = vld [vmem:[%s3 + $0xd0] sm:$0xff]
  %v576 = vld [vmem:[%s3 + $0xd8] sm:$0xff]
  %v577 = vld [vmem:[%s3 + $0xe0] sm:$0xff]
  %v578 = vld [vmem:[%s3 + $0xe8] sm:$0xff]
  %v579 = vld [vmem:[%s3 + $0xf0] sm:$0xff]
  %v580 = vld [vmem:[%s3 + $0xf8] sm:$0xff]
  %v581 = vld [vmem:[%s3 + $0x100] sm:$0xff]
  %v582 = vld [vmem:[%s3 + $0x108] sm:$0xff]
  %v583 = vld [vmem:[%s3 + $0x110] sm:$0xff]
  %v584 = vld [vmem:[%s3 + $0x118] sm:$0xff]
  %v585 = vld [vmem:[%s3 + $0x120] sm:$0xff]
  %v586 = vld [vmem:[%s3 + $0x128] sm:$0xff]
  %v587 = vld [vmem:[%s3 + $0x130] sm:$0xff]
  %v588 = vld [vmem:[%s3 + $0x138] sm:$0xff]
  %v589 = vld [vmem:[%s3 + $0x140] sm:$0xff]
  %v590 = vld [vmem:[%s3 + $0x148] sm:$0xff]
  %v591 = vld [vmem:[%s3 + $0x150] sm:$0xff]
  %v592 = vld [vmem:[%s3 + $0x158] sm:$0xff]
  %v593 = vld [vmem:[%s3 + $0x160] sm:$0xff]
  %v594 = vld [vmem:[%s3 + $0x168] sm:$0xff]
  %v595 = vld [vmem:[%s3 + $0x170] sm:$0xff]
  %v596 = vld [vmem:[%s3 + $0x178] sm:$0xff]
  %v597 = vld [vmem:[%s3 + $0x180] sm:$0xff]
  %v598 = vld [vmem:[%s3 + $0x188] sm:$0xff]
  %v599 = vld [vmem:[%s3 + $0x190] sm:$0xff]
  %v600 = vld [vmem:[%s3 + $0x198] sm:$0xff]
  %v601 = vld [vmem:[%s3 + $0x1a0] sm:$0xff]
  %v602 = vld [vmem:[%s3 + $0x1a8] sm:$0xff]
  %v603 = vld [vmem:[%s3 + $0x1b0] sm:$0xff]
  %v604 = vld [vmem:[%s3 + $0x1b8] sm:$0xff]
  %v605 = vld [vmem:[%s3 + $0x1c0] sm:$0xff]
  %v606 = vld [vmem:[%s3 + $0x1c8] sm:$0xff]
  %v607 = vld [vmem:[%s3 + $0x1d0] sm:$0xff]
  %v608 = vld [vmem:[%s3 + $0x1d8] sm:$0xff]
  %v609 = vld [vmem:[%s3 + $0x1e0] sm:$0xff]
  %v610 = vld [vmem:[%s3 + $0x1e8] sm:$0xff]
  %v611 = vld [vmem:[%s3 + $0x1f0] sm:$0xff]
  %v612 = vld [vmem:[%s3 + $0x1f8] sm:$0xff]
  %v613 = vld [vmem:[%s3 + $0x200] sm:$0xff]
  %v614 = vld [vmem:[%s3 + $0x208] sm:$0xff]
  %v615 = vld [vmem:[%s3 + $0x210] sm:$0xff]
  %v616 = vld [vmem:[%s3 + $0x218] sm:$0xff]
  %v617 = vld [vmem:[%s3 + $0x220] sm:$0xff]
  %v618 = vld [vmem:[%s3 + $0x228] sm:$0xff]
  %v619 = vld [vmem:[%s3 + $0x230] sm:$0xff]
  %v620 = vld [vmem:[%s3 + $0x238] sm:$0xff]
  %v621 = vld [vmem:[%s3 + $0x240] sm:$0xff]
  %v622 = vld [vmem:[%s3 + $0x248] sm:$0xff]
  %v623 = vld [vmem:[%s3 + $0x250] sm:$0xff]
  %v624 = vld [vmem:[%s3 + $0x258] sm:$0xff]
  %v625 = vld [vmem:[%s3 + $0x260] sm:$0xff]
  %v626 = vld [vmem:[%s3 + $0x268] sm:$0xff]
  %v627 = vld [vmem:[%s3 + $0x270] sm:$0xff]
  %v628 = vld [vmem:[%s3 + $0x278] sm:$0xff]
  %v629 = vld [vmem:[%s3 + $0x280] sm:$0xff]
  %v630 = vld [vmem:[%s3 + $0x288] sm:$0xff]
  %v631 = vld [vmem:[%s3 + $0x290] sm:$0xff]
  %v632 = vld [vmem:[%s3 + $0x298] sm:$0xff]
  %v633 = vld [vmem:[%s3 + $0x2a0] sm:$0xff]
  %v634 = vld [vmem:[%s3 + $0x2a8] sm:$0xff]
  %v635 = vld [vmem:[%s3 + $0x2b0] sm:$0xff]
  %v636 = vld [vmem:[%s3 + $0x2b8] sm:$0xff]
  %v637 = vld [vmem:[%s3 + $0x2c0] sm:$0xff]
  %v638 = vld [vmem:[%s3 + $0x2c8] sm:$0xff]
  %v639 = vld [vmem:[%s3 + $0x2d0] sm:$0xff]
  %v640 = vld [vmem:[%s3 + $0x2d8] sm:$0xff]
  %v641 = vld [vmem:[%s3 + $0x2e0] sm:$0xff]
  %v642 = vld [vmem:[%s3 + $0x2e8] sm:$0xff]
  %v643 = vld [vmem:[%s3 + $0x2f0] sm:$0xff]
  %v644 = vld [vmem:[%s3 + $0x2f8] sm:$0xff]
  %645 = vmatprep.subr.mxu0 0.0
  %646 = vmatpush1.msra.mxu0 %v549
  %647 = vmatprep.subr.mxu0 0.0
  %648 = vmatpush1.msra.mxu0 %v550
  %649 = vmatprep.subr.mxu0 0.0
  %650 = vmatpush1.msra.mxu0 %v551
  %651 = vmatprep.subr.mxu0 0.0
  %652 = vmatpush1.msra.mxu0 %v552
  %653 = vmatprep.subr.mxu0 0.0
  %654 = vmatpush1.msra.mxu0 %v553
  %655 = vmatprep.subr.mxu0 0.0
  %656 = vmatpush1.msra.mxu0 %v554
  %657 = vmatprep.subr.mxu0 0.0
  %658 = vmatpush1.msra.mxu0 %v555
  %659 = vmatprep.subr.mxu0 0.0
  %660 = vmatpush1.msra.mxu0 %v556
  %661 = vmatprep.subr.mxu0 0.0
  %662 = vmatpush1.msra.mxu0 %v557
  %663 = vmatprep.subr.mxu0 0.0
  %664 = vmatpush1.msra.mxu0 %v558
  %665 = vmatprep.subr.mxu0 0.0
  %666 = vmatpush1.msra.mxu0 %v559
  %667 = vmatprep.subr.mxu0 0.0
  %668 = vmatpush1.msra.mxu0 %v560
  %669 = vmatprep.subr.mxu0 0.0
  %670 = vmatpush1.msra.mxu0 %v561
  %671 = vmatprep.subr.mxu0 0.0
  %672 = vmatpush1.msra.mxu0 %v562
  %673 = vmatprep.subr.mxu0 0.0
  %674 = vmatpush1.msra.mxu0 %v563
  %675 = vmatprep.subr.mxu0 0.0
  %676 = vmatpush1.msra.mxu0 %v564
  %677 = vmatprep.subr.mxu0 0.0
  %678 = vmatpush1.msra.mxu0 %v565
  %679 = vmatprep.subr.mxu0 0.0
  %680 = vmatpush1.msra.mxu0 %v566
  %681 = vmatprep.subr.mxu0 0.0
  %682 = vmatpush1.msra.mxu0 %v567
  %683 = vmatprep.subr.mxu0 0.0
  %684 = vmatpush1.msra.mxu0 %v568
  %685 = vmatprep.subr.mxu0 0.0
  %686 = vmatpush1.msra.mxu0 %v569
  %687 = vmatprep.subr.mxu0 0.0
  %688 = vmatpush1.msra.mxu0 %v570
  %689 = vmatprep.subr.mxu0 0.0
  %690 = vmatpush1.msra.mxu0 %v571
  %691 = vmatprep.subr.mxu0 0.0
  %692 = vmatpush1.msra.mxu0 %v572
  %693 = vmatprep.subr.mxu0 0.0
  %694 = vmatpush1.msra.mxu0 %v573
  %695 = vmatprep.subr.mxu0 0.0
  %696 = vmatpush1.msra.mxu0 %v574
  %697 = vmatprep.subr.mxu0 0.0
  %698 = vmatpush1.msra.mxu0 %v575
  %699 = vmatprep.subr.mxu0 0.0
  %700 = vmatpush1.msra.mxu0 %v576
  %701 = vmatprep.subr.mxu0 0.0
  %702 = vmatpush1.msra.mxu0 %v577
  %703 = vmatprep.subr.mxu0 0.0
  %704 = vmatpush1.msra.mxu0 %v578
  %705 = vmatprep.subr.mxu0 0.0
  %706 = vmatpush1.msra.mxu0 %v579
  %707 = vmatprep.subr.mxu0 0.0
  %708 = vmatpush1.msra.mxu0 %v580
  %709 = vmatprep.mubr.f32.mxu0 %v463
  %710 = vmatmul.mubr.f32.gmra.mrb[0].mxu0 %v461
  %v711 = vpop.f32.mrb[0].mxu0
  %v712 = vadd.f32 0.0, %v711
  %v713 = vpop.f32.mrb[0].mxu0
  %714 = vdwg.mxu0
  %715 = vmatprep.subr.mxu0 0.0
  %716 = vmatpush1.msra.mxu0 %v581
  %717 = vmatprep.subr.mxu0 0.0
  %718 = vmatpush1.msra.mxu0 %v582
  %719 = vmatprep.subr.mxu0 0.0
  %720 = vmatpush1.msra.mxu0 %v583
  %721 = vmatprep.subr.mxu0 0.0
  %722 = vmatpush1.msra.mxu0 %v584
  %723 = vmatprep.subr.mxu0 0.0
  %724 = vmatpush1.msra.mxu0 %v585
  %725 = vmatprep.subr.mxu0 0.0
  %726 = vmatpush1.msra.mxu0 %v586
  %727 = vmatprep.subr.mxu0 0.0
  %728 = vmatpush1.msra.mxu0 %v587
  %729 = vmatprep.subr.mxu0 0.0
  %730 = vmatpush1.msra.mxu0 %v588
  %731 = vmatprep.subr.mxu0 0.0
  %732 = vmatpush1.msra.mxu0 %v589
  %733 = vmatprep.subr.mxu0 0.0
  %734 = vmatpush1.msra.mxu0 %v590
  %735 = vmatprep.subr.mxu0 0.0
  %736 = vmatpush1.msra.mxu0 %v591
  %737 = vmatprep.subr.mxu0 0.0
  %738 = vmatpush1.msra.mxu0 %v592
  %739 = vmatprep.subr.mxu0 0.0
  %740 = vmatpush1.msra.mxu0 %v593
  %741 = vmatprep.subr.mxu0 0.0
  %742 = vmatpush1.msra.mxu0 %v594
  %743 = vmatprep.subr.mxu0 0.0
  %744 = vmatpush1.msra.mxu0 %v595
  %745 = vmatprep.subr.mxu0 0.0
  %746 = vmatpush1.msra.mxu0 %v596
  %747 = vmatprep.subr.mxu0 0.0
  %748 = vmatpush1.msra.mxu0 %v597
  %749 = vmatprep.subr.mxu0 0.0
  %750 = vmatpush1.msra.mxu0 %v598
  %751 = vmatprep.subr.mxu0 0.0
  %752 = vmatpush1.msra.mxu0 %v599
  %753 = vmatprep.subr.mxu0 0.0
  %754 = vmatpush1.msra.mxu0 %v600
  %755 = vmatprep.subr.mxu0 0.0
  %756 = vmatpush1.msra.mxu0 %v601
  %757 = vmatprep.subr.mxu0 0.0
  %758 = vmatpush1.msra.mxu0 %v602
  %759 = vmatprep.subr.mxu0 0.0
  %760 = vmatpush1.msra.mxu0 %v603
  %761 = vmatprep.subr.mxu0 0.0
  %762 = vmatpush1.msra.mxu0 %v604
  %763 = vmatprep.subr.mxu0 0.0
  %764 = vmatpush1.msra.mxu0 %v605
  %765 = vmatprep.subr.mxu0 0.0
  %766 = vmatpush1.msra.mxu0 %v606
  %767 = vmatprep.subr.mxu0 0.0
  %768 = vmatpush1.msra.mxu0 %v607
  %769 = vmatprep.subr.mxu0 0.0
  %770 = vmatpush1.msra.mxu0 %v608
  %771 = vmatprep.subr.mxu0 0.0
  %772 = vmatpush1.msra.mxu0 %v609
  %773 = vmatprep.subr.mxu0 0.0
  %774 = vmatpush1.msra.mxu0 %v610
  %775 = vmatprep.subr.mxu0 0.0
  %776 = vmatpush1.msra.mxu0 %v611
  %777 = vmatprep.subr.mxu0 0.0
  %778 = vmatpush1.msra.mxu0 %v612
  %779 = vmatprep.mubr.f32.mxu0 %v504
  %780 = vmatmul.mubr.f32.gmra.mrb[0].mxu0 %v502
  %v781 = vpop.f32.mrb[0].mxu0
  %v782 = vadd.f32 %v712, %v781
  %v783 = vpop.f32.mrb[0].mxu0
  %784 = vdwg.mxu0
  %785 = vmatprep.subr.mxu0 0.0
  %786 = vmatpush1.msra.mxu0 %v613
  %787 = vmatprep.subr.mxu0 0.0
  %788 = vmatpush1.msra.mxu0 %v614
  %789 = vmatprep.subr.mxu0 0.0
  %790 = vmatpush1.msra.mxu0 %v615
  %791 = vmatprep.subr.mxu0 0.0
  %792 = vmatpush1.msra.mxu0 %v616
  %793 = vmatprep.subr.mxu0 0.0
  %794 = vmatpush1.msra.mxu0 %v617
  %795 = vmatprep.subr.mxu0 0.0
  %796 = vmatpush1.msra.mxu0 %v618
  %797 = vmatprep.subr.mxu0 0.0
  %798 = vmatpush1.msra.mxu0 %v619
  %799 = vmatprep.subr.mxu0 0.0
  %800 = vmatpush1.msra.mxu0 %v620
  %801 = vmatprep.subr.mxu0 0.0
  %802 = vmatpush1.msra.mxu0 %v621
  %803 = vmatprep.subr.mxu0 0.0
  %804 = vmatpush1.msra.mxu0 %v622
  %805 = vmatprep.subr.mxu0 0.0
  %806 = vmatpush1.msra.mxu0 %v623
  %807 = vmatprep.subr.mxu0 0.0
  %808 = vmatpush1.msra.mxu0 %v624
  %809 = vmatprep.subr.mxu0 0.0
  %810 = vmatpush1.msra.mxu0 %v625
  %811 = vmatprep.subr.mxu0 0.0
  %812 = vmatpush1.msra.mxu0 %v626
  %813 = vmatprep.subr.mxu0 0.0
  %814 = vmatpush1.msra.mxu0 %v627
  %815 = vmatprep.subr.mxu0 0.0
  %816 = vmatpush1.msra.mxu0 %v628
  %817 = vmatprep.subr.mxu0 0.0
  %818 = vmatpush1.msra.mxu0 %v629
  %819 = vmatprep.subr.mxu0 0.0
  %820 = vmatpush1.msra.mxu0 %v630
  %821 = vmatprep.subr.mxu0 0.0
  %822 = vmatpush1.msra.mxu0 %v631
  %823 = vmatprep.subr.mxu0 0.0
  %824 = vmatpush1.msra.mxu0 %v632
  %825 = vmatprep.subr.mxu0 0.0
  %826 = vmatpush1.msra.mxu0 %v633
  %827 = vmatprep.subr.mxu0 0.0
  %828 = vmatpush1.msra.mxu0 %v634
  %829 = vmatprep.subr.mxu0 0.0
  %830 = vmatpush1.msra.mxu0 %v635
  %831 = vmatprep.subr.mxu0 0.0
  %832 = vmatpush1.msra.mxu0 %v636
  %833 = vmatprep.subr.mxu0 0.0
  %834 = vmatpush1.msra.mxu0 %v637
  %835 = vmatprep.subr.mxu0 0.0
  %836 = vmatpush1.msra.mxu0 %v638
  %837 = vmatprep.subr.mxu0 0.0
  %838 = vmatpush1.msra.mxu0 %v639
  %839 = vmatprep.subr.mxu0 0.0
  %840 = vmatpush1.msra.mxu0 %v640
  %841 = vmatprep.subr.mxu0 0.0
  %842 = vmatpush1.msra.mxu0 %v641
  %843 = vmatprep.subr.mxu0 0.0
  %844 = vmatpush1.msra.mxu0 %v642
  %845 = vmatprep.subr.mxu0 0.0
  %846 = vmatpush1.msra.mxu0 %v643
  %847 = vmatprep.subr.mxu0 0.0
  %848 = vmatpush1.msra.mxu0 %v644
  %849 = vmatprep.mubr.f32.mxu0 %v545
  %850 = vmatmul.mubr.f32.gmra.mrb[0].mxu0 %v543
  %v851 = vpop.f32.mrb[0].mxu0
  %v852 = vadd.f32 %v782, %v851
  %v853 = vpop.f32.mrb[0].mxu0
  %854 = vdwg.mxu0
  %v855 = vsel %vm21, %v852, 0.0
  %v856 = vrot.slane %v855, 4
  %v857 = vadd.f32 %v855, %v856
  %v858 = vrot.slane %v857, 2
  %v859 = vadd.f32 %v857, %v858
  %v860 = vrot.slane %v859, 1
  %v861 = vadd.f32 %v859, %v860
  %v862 = vmul.f32 %v461, %v461
  %v863 = vmul.f32 %v463, %v463
  %v864 = vmul.f32 %v502, %v502
  %v865 = vmul.f32 %v504, %v504
  %v866 = vmul.f32 %v543, %v543
  %v867 = vmul.f32 %v545, %v545
  %868 = vmatprep.subr.mxu0 0.0
  %869 = vmatpush1.msra.mxu0 %v549
  %870 = vmatprep.subr.mxu0 0.0
  %871 = vmatpush1.msra.mxu0 %v550
  %872 = vmatprep.subr.mxu0 0.0
  %873 = vmatpush1.msra.mxu0 %v551
  %874 = vmatprep.subr.mxu0 0.0
  %875 = vmatpush1.msra.mxu0 %v552
  %876 = vmatprep.subr.mxu0 0.0
  %877 = vmatpush1.msra.mxu0 %v553
  %878 = vmatprep.subr.mxu0 0.0
  %879 = vmatpush1.msra.mxu0 %v554
  %880 = vmatprep.subr.mxu0 0.0
  %881 = vmatpush1.msra.mxu0 %v555
  %882 = vmatprep.subr.mxu0 0.0
  %883 = vmatpush1.msra.mxu0 %v556
  %884 = vmatprep.subr.mxu0 0.0
  %885 = vmatpush1.msra.mxu0 %v557
  %886 = vmatprep.subr.mxu0 0.0
  %887 = vmatpush1.msra.mxu0 %v558
  %888 = vmatprep.subr.mxu0 0.0
  %889 = vmatpush1.msra.mxu0 %v559
  %890 = vmatprep.subr.mxu0 0.0
  %891 = vmatpush1.msra.mxu0 %v560
  %892 = vmatprep.subr.mxu0 0.0
  %893 = vmatpush1.msra.mxu0 %v561
  %894 = vmatprep.subr.mxu0 0.0
  %895 = vmatpush1.msra.mxu0 %v562
  %896 = vmatprep.subr.mxu0 0.0
  %897 = vmatpush1.msra.mxu0 %v563
  %898 = vmatprep.subr.mxu0 0.0
  %899 = vmatpush1.msra.mxu0 %v564
  %900 = vmatprep.subr.mxu0 0.0
  %901 = vmatpush1.msra.mxu0 %v565
  %902 = vmatprep.subr.mxu0 0.0
  %903 = vmatpush1.msra.mxu0 %v566
  %904 = vmatprep.subr.mxu0 0.0
  %905 = vmatpush1.msra.mxu0 %v567
  %906 = vmatprep.subr.mxu0 0.0
  %907 = vmatpush1.msra.mxu0 %v568
  %908 = vmatprep.subr.mxu0 0.0
  %909 = vmatpush1.msra.mxu0 %v569
  %910 = vmatprep.subr.mxu0 0.0
  %911 = vmatpush1.msra.mxu0 %v570
  %912 = vmatprep.subr.mxu0 0.0
  %913 = vmatpush1.msra.mxu0 %v571
  %914 = vmatprep.subr.mxu0 0.0
  %915 = vmatpush1.msra.mxu0 %v572
  %916 = vmatprep.subr.mxu0 0.0
  %917 = vmatpush1.msra.mxu0 %v573
  %918 = vmatprep.subr.mxu0 0.0
  %919 = vmatpush1.msra.mxu0 %v574
  %920 = vmatprep.subr.mxu0 0.0
  %921 = vmatpush1.msra.mxu0 %v575
  %922 = vmatprep.subr.mxu0 0.0
  %923 = vmatpush1.msra.mxu0 %v576
  %924 = vmatprep.subr.mxu0 0.0
  %925 = vmatpush1.msra.mxu0 %v577
  %926 = vmatprep.subr.mxu0 0.0
  %927 = vmatpush1.msra.mxu0 %v578
  %928 = vmatprep.subr.mxu0 0.0
  %929 = vmatpush1.msra.mxu0 %v579
  %930 = vmatprep.subr.mxu0 0.0
  %931 = vmatpush1.msra.mxu0 %v580
  %932 = vmatprep.mubr.f32.mxu0 %v863
  %933 = vmatmul.mubr.f32.gmra.mrb[0].mxu0 %v862
  %v934 = vpop.f32.mrb[0].mxu0
  %v935 = vadd.f32 0.0, %v934
  %v936 = vpop.f32.mrb[0].mxu0
  %937 = vdwg.mxu0
  %938 = vmatprep.subr.mxu0 0.0
  %939 = vmatpush1.msra.mxu0 %v581
  %940 = vmatprep.subr.mxu0 0.0
  %941 = vmatpush1.msra.mxu0 %v582
  %942 = vmatprep.subr.mxu0 0.0
  %943 = vmatpush1.msra.mxu0 %v583
  %944 = vmatprep.subr.mxu0 0.0
  %945 = vmatpush1.msra.mxu0 %v584
  %946 = vmatprep.subr.mxu0 0.0
  %947 = vmatpush1.msra.mxu0 %v585
  %948 = vmatprep.subr.mxu0 0.0
  %949 = vmatpush1.msra.mxu0 %v586
  %950 = vmatprep.subr.mxu0 0.0
  %951 = vmatpush1.msra.mxu0 %v587
  %952 = vmatprep.subr.mxu0 0.0
  %953 = vmatpush1.msra.mxu0 %v588
  %954 = vmatprep.subr.mxu0 0.0
  %955 = vmatpush1.msra.mxu0 %v589
  %956 = vmatprep.subr.mxu0 0.0
  %957 = vmatpush1.msra.mxu0 %v590
  %958 = vmatprep.subr.mxu0 0.0
  %959 = vmatpush1.msra.mxu0 %v591
  %960 = vmatprep.subr.mxu0 0.0
  %961 = vmatpush1.msra.mxu0 %v592
  %962 = vmatprep.subr.mxu0 0.0
  %963 = vmatpush1.msra.mxu0 %v593
  %964 = vmatprep.subr.mxu0 0.0
  %965 = vmatpush1.msra.mxu0 %v594
  %966 = vmatprep.subr.mxu0 0.0
  %967 = vmatpush1.msra.mxu0 %v595
  %968 = vmatprep.subr.mxu0 0.0
  %969 = vmatpush1.msra.mxu0 %v596
  %970 = vmatprep.subr.mxu0 0.0
  %971 = vmatpush1.msra.mxu0 %v597
  %972 = vmatprep.subr.mxu0 0.0
  %973 = vmatpush1.msra.mxu0 %v598
  %974 = vmatprep.subr.mxu0 0.0
  %975 = vmatpush1.msra.mxu0 %v599
  %976 = vmatprep.subr.mxu0 0.0
  %977 = vmatpush1.msra.mxu0 %v600
  %978 = vmatprep.subr.mxu0 0.0
  %979 = vmatpush1.msra.mxu0 %v601
  %980 = vmatprep.subr.mxu0 0.0
  %981 = vmatpush1.msra.mxu0 %v602
  %982 = vmatprep.subr.mxu0 0.0
  %983 = vmatpush1.msra.mxu0 %v603
  %984 = vmatprep.subr.mxu0 0.0
  %985 = vmatpush1.msra.mxu0 %v604
  %986 = vmatprep.subr.mxu0 0.0
  %987 = vmatpush1.msra.mxu0 %v605
  %988 = vmatprep.subr.mxu0 0.0
  %989 = vmatpush1.msra.mxu0 %v606
  %990 = vmatprep.subr.mxu0 0.0
  %991 = vmatpush1.msra.mxu0 %v607
  %992 = vmatprep.subr.mxu0 0.0
  %993 = vmatpush1.msra.mxu0 %v608
  %994 = vmatprep.subr.mxu0 0.0
  %995 = vmatpush1.msra.mxu0 %v609
  %996 = vmatprep.subr.mxu0 0.0
  %997 = vmatpush1.msra.mxu0 %v610
  %998 = vmatprep.subr.mxu0 0.0
  %999 = vmatpush1.msra.mxu0 %v611
  %1000 = vmatprep.subr.mxu0 0.0
  %1001 = vmatpush1.msra.mxu0 %v612
  %1002 = vmatprep.mubr.f32.mxu0 %v865
  %1003 = vmatmul.mubr.f32.gmra.mrb[0].mxu0 %v864
  %v1004 = vpop.f32.mrb[0].mxu0
  %v1005 = vadd.f32 %v935, %v1004
  %v1006 = vpop.f32.mrb[0].mxu0
  %1007 = vdwg.mxu0
  %1008 = vmatprep.subr.mxu0 0.0
  %1009 = vmatpush1.msra.mxu0 %v613
  %1010 = vmatprep.subr.mxu0 0.0
  %1011 = vmatpush1.msra.mxu0 %v614
  %1012 = vmatprep.subr.mxu0 0.0
  %1013 = vmatpush1.msra.mxu0 %v615
  %1014 = vmatprep.subr.mxu0 0.0
  %1015 = vmatpush1.msra.mxu0 %v616
  %1016 = vmatprep.subr.mxu0 0.0
  %1017 = vmatpush1.msra.mxu0 %v617
  %1018 = vmatprep.subr.mxu0 0.0
  %1019 = vmatpush1.msra.mxu0 %v618
  %1020 = vmatprep.subr.mxu0 0.0
  %1021 = vmatpush1.msra.mxu0 %v619
  %1022 = vmatprep.subr.mxu0 0.0
  %1023 = vmatpush1.msra.mxu0 %v620
  %1024 = vmatprep.subr.mxu0 0.0
  %1025 = vmatpush1.msra.mxu0 %v621
  %1026 = vmatprep.subr.mxu0 0.0
  %1027 = vmatpush1.msra.mxu0 %v622
  %1028 = vmatprep.subr.mxu0 0.0
  %1029 = vmatpush1.msra.mxu0 %v623
  %1030 = vmatprep.subr.mxu0 0.0
  %1031 = vmatpush1.msra.mxu0 %v624
  %1032 = vmatprep.subr.mxu0 0.0
  %1033 = vmatpush1.msra.mxu0 %v625
  %1034 = vmatprep.subr.mxu0 0.0
  %1035 = vmatpush1.msra.mxu0 %v626
  %1036 = vmatprep.subr.mxu0 0.0
  %1037 = vmatpush1.msra.mxu0 %v627
  %1038 = vmatprep.subr.mxu0 0.0
  %1039 = vmatpush1.msra.mxu0 %v628
  %1040 = vmatprep.subr.mxu0 0.0
  %1041 = vmatpush1.msra.mxu0 %v629
  %1042 = vmatprep.subr.mxu0 0.0
  %1043 = vmatpush1.msra.mxu0 %v630
  %1044 = vmatprep.subr.mxu0 0.0
  %1045 = vmatpush1.msra.mxu0 %v631
  %1046 = vmatprep.subr.mxu0 0.0
  %1047 = vmatpush1.msra.mxu0 %v632
  %1048 = vmatprep.subr.mxu0 0.0
  %1049 = vmatpush1.msra.mxu0 %v633
  %1050 = vmatprep.subr.mxu0 0.0
  %1051 = vmatpush1.msra.mxu0 %v634
  %1052 = vmatprep.subr.mxu0 0.0
  %1053 = vmatpush1.msra.mxu0 %v635
  %1054 = vmatprep.subr.mxu0 0.0
  %1055 = vmatpush1.msra.mxu0 %v636
  %1056 = vmatprep.subr.mxu0 0.0
  %1057 = vmatpush1.msra.mxu0 %v637
  %1058 = vmatprep.subr.mxu0 0.0
  %1059 = vmatpush1.msra.mxu0 %v638
  %1060 = vmatprep.subr.mxu0 0.0
  %1061 = vmatpush1.msra.mxu0 %v639
  %1062 = vmatprep.subr.mxu0 0.0
  %1063 = vmatpush1.msra.mxu0 %v640
  %1064 = vmatprep.subr.mxu0 0.0
  %1065 = vmatpush1.msra.mxu0 %v641
  %1066 = vmatprep.subr.mxu0 0.0
  %1067 = vmatpush1.msra.mxu0 %v642
  %1068 = vmatprep.subr.mxu0 0.0
  %1069 = vmatpush1.msra.mxu0 %v643
  %1070 = vmatprep.subr.mxu0 0.0
  %1071 = vmatpush1.msra.mxu0 %v644
  %1072 = vmatprep.mubr.f32.mxu0 %v867
  %1073 = vmatmul.mubr.f32.gmra.mrb[0].mxu0 %v866
  %v1074 = vpop.f32.mrb[0].mxu0
  %v1075 = vadd.f32 %v1005, %v1074
  %v1076 = vpop.f32.mrb[0].mxu0
  %1077 = vdwg.mxu0
  %v1078 = vsel %vm21, %v1075, 0.0
  %v1079 = vrot.slane %v1078, 4
  %v1080 = vadd.f32 %v1078, %v1079
  %v1081 = vrot.slane %v1080, 2
  %v1082 = vadd.f32 %v1080, %v1081
  %v1083 = vrot.slane %v1082, 1
  %v1084 = vadd.f32 %v1082, %v1083
  %v1085 = vmul.f32 %v861, 0.00048828125
  %v1086 = vmul.f32 %v1084, 0.00048828125
  %v1087 = vmul.f32 %v1085, %v1085
  %v1088 = vsub.f32 %v1086, %v1087
  %v1089 = vmax.f32 %v1088, 0.0
  %v1090 = vld [vmem:[%s2 + $0x8] sm:$0x1]
  %v1091 = vld [vmem:[%s2 + $0x9] sm:$0x1]
  %v1092 = vadd.f32 %v1089, 1e-05
  %v1093 = vrsqrt.pop %v1092
  %v1094 = vmul.f32 %v1090, %v1093
  %v1095 = vmul.f32 %v1085, %v1094
  %v1096 = vsub.f32 %v1091, %v1095
  %v1097 = vld [vmem:[%s1 + $0x198] sm:$0xff]
  %v1098 = vld [vmem:[%s1 + $0x1a0] sm:$0xf]
  %v1099 = vunpack.c.l.bf16 %v1097
  %v1100 = vunpack.c.h.bf16 %v1097
  %v1101 = vunpack.c.l.bf16 %v1098
  %v1103 = vrot.slane %v1096, 7
  %vm1105 = vcmask 1040384
  %v1106 = vsel %vm1105, %v1094, %v1103
  %v1108 = vsel %vm21, %v1106, 0
  %1110 = vmatprep.subr.mxu0 %v1100
  %1111 = vmatpush1.msra.mxu0 %v1099
  %1112 = vmatprep.subr.mxu0 0.0
  %1113 = vmatpush1.msra.mxu0 0.0
  %1114 = vmatprep.subr.mxu0 0.0
  %1115 = vmatpush1.msra.mxu0 0.0
  %1116 = vmatprep.subr.mxu0 0.0
  %1117 = vmatpush1.msra.mxu0 0.0
  %1118 = vmatprep.subr.mxu0 0.0
  %1119 = vmatpush1.msra.mxu0 0.0
  %1120 = vmatprep.subr.mxu0 0.0
  %1121 = vmatpush1.msra.mxu0 0.0
  %1122 = vmatprep.subr.mxu0 0.0
  %1123 = vmatpush1.msra.mxu0 0.0
  %1124 = vmatprep.subr.mxu0 0.0
  %1125 = vmatpush1.msra.mxu0 0.0
  %1126 = vmatprep.subr.mxu0 0.0
  %1127 = vmatpush1.msra.mxu0 0.0
  %1128 = vmatprep.subr.mxu0 0.0
  %1129 = vmatpush1.msra.mxu0 0.0
  %1130 = vmatprep.subr.mxu0 0.0
  %1131 = vmatpush1.msra.mxu0 0.0
  %1132 = vmatprep.subr.mxu0 0.0
  %1133 = vmatpush1.msra.mxu0 0.0
  %1134 = vmatprep.subr.mxu0 0.0
  %1135 = vmatpush1.msra.mxu0 0.0
  %1136 = vmatprep.subr.mxu0 0.0
  %1137 = vmatpush1.msra.mxu0 0.0
  %1138 = vmatprep.subr.mxu0 0.0
  %1139 = vmatpush1.msra.mxu0 0.0
  %1140 = vmatprep.subr.mxu0 0.0
  %1141 = vmatpush1.msra.mxu0 0.0
  %1142 = vmatprep.subr.mxu0 0.0
  %1143 = vmatpush1.msra.mxu0 0.0
  %1144 = vmatprep.subr.mxu0 0.0
  %1145 = vmatpush1.msra.mxu0 0.0
  %1146 = vmatprep.subr.mxu0 0.0
  %1147 = vmatpush1.msra.mxu0 0.0
  %1148 = vmatprep.subr.mxu0 0.0
  %1149 = vmatpush1.msra.mxu0 0.0
  %1150 = vmatprep.subr.mxu0 0.0
  %1151 = vmatpush1.msra.mxu0 0.0
  %1152 = vmatprep.subr.mxu0 0.0
  %1153 = vmatpush1.msra.mxu0 0.0
  %1154 = vmatprep.subr.mxu0 0.0
  %1155 = vmatpush1.msra.mxu0 0.0
  %1156 = vmatprep.subr.mxu0 0.0
  %1157 = vmatpush1.msra.mxu0 0.0
  %1158 = vmatprep.subr.mxu0 0.0
  %1159 = vmatpush1.msra.mxu0 0.0
  %1160 = vmatprep.subr.mxu0 0.0
  %1161 = vmatpush1.msra.mxu0 0.0
  %1162 = vmatprep.subr.mxu0 0.0
  %1163 = vmatpush1.msra.mxu0 0.0
  %1164 = vmatprep.subr.mxu0 0.0
  %1165 = vmatpush1.msra.mxu0 0.0
  %1166 = vmatprep.subr.mxu0 0.0
  %1167 = vmatpush1.msra.mxu0 0.0
  %1168 = vmatprep.subr.mxu0 0.0
  %1169 = vmatpush1.msra.mxu0 0.0
  %1170 = vmatprep.subr.mxu0 0.0
  %1171 = vmatpush1.msra.mxu0 0.0
  %1172 = vmatprep.subr.mxu0 0.0
  %1173 = vmatpush1.msra.mxu0 0.0
  %1174 = vmatprep.mubr.f32.mxu0 0.0
  %1175 = vmatmul.mubr.f32.gmra.mrb[0].mxu0 %v1108
  %v1176 = vpop.f32.mrb[0].mxu0
  %v1177 = vadd.f32 0.0, %v1176
  %v1178 = vpop.f32.mrb[0].mxu0
  %v1179 = vadd.f32 0.0, %v1178
  %1180 = vdwg.mxu0
  %1181 = vmatprep.subr.mxu0 0.0
  %1182 = vmatpush1.msra.mxu0 %v1101
  %1183 = vmatprep.subr.mxu0 0.0
  %1184 = vmatpush1.msra.mxu0 0.0
  %1185 = vmatprep.subr.mxu0 0.0
  %1186 = vmatpush1.msra.mxu0 0.0
  %1187 = vmatprep.subr.mxu0 0.0
  %1188 = vmatpush1.msra.mxu0 0.0
  %1189 = vmatprep.subr.mxu0 0.0
  %1190 = vmatpush1.msra.mxu0 0.0
  %1191 = vmatprep.subr.mxu0 0.0
  %1192 = vmatpush1.msra.mxu0 0.0
  %1193 = vmatprep.subr.mxu0 0.0
  %1194 = vmatpush1.msra.mxu0 0.0
  %1195 = vmatprep.subr.mxu0 0.0
  %1196 = vmatpush1.msra.mxu0 0.0
  %1197 = vmatprep.subr.mxu0 0.0
  %1198 = vmatpush1.msra.mxu0 0.0
  %1199 = vmatprep.subr.mxu0 0.0
  %1200 = vmatpush1.msra.mxu0 0.0
  %1201 = vmatprep.subr.mxu0 0.0
  %1202 = vmatpush1.msra.mxu0 0.0
  %1203 = vmatprep.subr.mxu0 0.0
  %1204 = vmatpush1.msra.mxu0 0.0
  %1205 = vmatprep.subr.mxu0 0.0
  %1206 = vmatpush1.msra.mxu0 0.0
  %1207 = vmatprep.subr.mxu0 0.0
  %1208 = vmatpush1.msra.mxu0 0.0
  %1209 = vmatprep.subr.mxu0 0.0
  %1210 = vmatpush1.msra.mxu0 0.0
  %1211 = vmatprep.subr.mxu0 0.0
  %1212 = vmatpush1.msra.mxu0 0.0
  %1213 = vmatprep.subr.mxu0 0.0
  %1214 = vmatpush1.msra.mxu0 0.0
  %1215 = vmatprep.subr.mxu0 0.0
  %1216 = vmatpush1.msra.mxu0 0.0
  %1217 = vmatprep.subr.mxu0 0.0
  %1218 = vmatpush1.msra.mxu0 0.0
  %1219 = vmatprep.subr.mxu0 0.0
  %1220 = vmatpush1.msra.mxu0 0.0
  %1221 = vmatprep.subr.mxu0 0.0
  %1222 = vmatpush1.msra.mxu0 0.0
  %1223 = vmatprep.subr.mxu0 0.0
  %1224 = vmatpush1.msra.mxu0 0.0
  %1225 = vmatprep.subr.mxu0 0.0
  %1226 = vmatpush1.msra.mxu0 0.0
  %1227 = vmatprep.subr.mxu0 0.0
  %1228 = vmatpush1.msra.mxu0 0.0
  %1229 = vmatprep.subr.mxu0 0.0
  %1230 = vmatpush1.msra.mxu0 0.0
  %1231 = vmatprep.subr.mxu0 0.0
  %1232 = vmatpush1.msra.mxu0 0.0
  %1233 = vmatprep.subr.mxu0 0.0
  %1234 = vmatpush1.msra.mxu0 0.0
  %1235 = vmatprep.subr.mxu0 0.0
  %1236 = vmatpush1.msra.mxu0 0.0
  %1237 = vmatprep.subr.mxu0 0.0
  %1238 = vmatpush1.msra.mxu0 0.0
  %1239 = vmatprep.subr.mxu0 0.0
  %1240 = vmatpush1.msra.mxu0 0.0
  %1241 = vmatprep.subr.mxu0 0.0
  %1242 = vmatpush1.msra.mxu0 0.0
  %1243 = vmatprep.subr.mxu0 0.0
  %1244 = vmatpush1.msra.mxu0 0.0
  %1245 = vmatprep.mubr.f32.mxu0 0.0
  %1246 = vmatmul.mubr.f32.gmra.mrb[0].mxu0 %v1108
  %v1247 = vpop.f32.mrb[0].mxu0
  %v1248 = vadd.f32 0.0, %v1247
  %v1249 = vpop.f32.mrb[0].mxu0
  %1250 = vdwg.mxu0
  %v1251 = vlaneseq
  %v1252 = vshrl.u32 %v1251, 7
  %v1253 = vsub.s32 0, %v1252
  %v1254 = vrot.slane %v1177, %v1253
  %v1255 = vmul.f32 %v461, %v1254
  %v1256 = vlaneseq
  %v1257 = vshrl.u32 %v1256, 7
  %v1258 = vsub.s32 1, %v1257
  %v1259 = vrot.slane %v1177, %v1258
  %v1260 = vadd.f32 %v1255, %v1259
  %v1261 = vmul.f32 %v1260, %v1260
  %1262 = vst [vmem:[#allocation2] sm:$0xf] %v1261
  %v1264 = vrot.slane %v1261, 4
  %1266 = vst [vmem:[#allocation2 + $0x8] sm:$0xf] %v1264
  %v1267 = vlaneseq
  %v1268 = vshrl.u32 %v1267, 7
  %v1269 = vsub.s32 0, %v1268
  %v1270 = vrot.slane %v1179, %v1269
  %v1271 = vmul.f32 %v463, %v1270
  %v1272 = vlaneseq
  %v1273 = vshrl.u32 %v1272, 7
  %v1274 = vsub.s32 1, %v1273
  %v1275 = vrot.slane %v1179, %v1274
  %v1276 = vadd.f32 %v1271, %v1275
  %v1277 = vmul.f32 %v1276, %v1276
  %v1279 = vrot.slane %v1277, 4
  %1281 = vst [vmem:[#allocation2] sm:$0xf0] %v1279
  %1282 = vst [vmem:[#allocation2 + $0x8] sm:$0xf0] %v1277
  %v1283 = vlaneseq
  %v1284 = vshrl.u32 %v1283, 7
  %v1285 = vsub.s32 0, %v1284
  %v1286 = vrot.slane %v1248, %v1285
  %v1287 = vmul.f32 %v502, %v1286
  %v1288 = vlaneseq
  %v1289 = vshrl.u32 %v1288, 7
  %v1290 = vsub.s32 1, %v1289
  %v1291 = vrot.slane %v1248, %v1290
  %v1292 = vadd.f32 %v1287, %v1291
  %v1293 = vmul.f32 %v1292, %v1292
  %1294 = vst [vmem:[#allocation2 + $0x10] sm:$0xf] %v1293
  %v1296 = vrot.slane %v1293, 4
  %1298 = vst [vmem:[#allocation2 + $0x18] sm:$0xf] %v1296
  %v1299 = vld [vmem:[#allocation2] sm:$0xff]
  %v1300 = vld [vmem:[#allocation2 + $0x8] sm:$0xff]
  %v1301 = vld [vmem:[#allocation2 + $0x10] sm:$0xf]
  %v1302 = vld [vmem:[#allocation2 + $0x18] sm:$0xf]
  %v1303 = vld [vmem:[%s2 + $0x10] sm:$0xff]
  %v1304 = vld [vmem:[%s2 + $0x18] sm:$0xff]
  %v1305 = vld [vmem:[%s2 + $0x20] sm:$0xff]
  %v1306 = vld [vmem:[%s2 + $0x28] sm:$0xff]
  %v1307 = vld [vmem:[%s2 + $0x30] sm:$0xff]
  %v1308 = vld [vmem:[%s2 + $0x38] sm:$0xff]
  %v1309 = vld [vmem:[%s2 + $0x40] sm:$0xff]
  %v1310 = vld [vmem:[%s2 + $0x48] sm:$0xff]
  %v1311 = vld [vmem:[%s2 + $0x50] sm:$0xff]
  %v1312 = vld [vmem:[%s2 + $0x58] sm:$0xff]
  %v1313 = vld [vmem:[%s2 + $0x60] sm:$0xff]
  %v1314 = vld [vmem:[%s2 + $0x68] sm:$0xff]
  %v1315 = vld [vmem:[%s2 + $0x70] sm:$0xff]
  %v1316 = vld [vmem:[%s2 + $0x78] sm:$0xff]
  %v1317 = vld [vmem:[%s2 + $0x80] sm:$0xff]
  %v1318 = vld [vmem:[%s2 + $0x88] sm:$0xff]
  %v1319 = vld [vmem:[%s2 + $0x90] sm:$0xff]
  %v1320 = vld [vmem:[%s2 + $0x98] sm:$0xff]
  %v1321 = vld [vmem:[%s2 + $0xa0] sm:$0xff]
  %v1322 = vld [vmem:[%s2 + $0xa8] sm:$0xff]
  %v1323 = vld [vmem:[%s2 + $0xb0] sm:$0xff]
  %v1324 = vld [vmem:[%s2 + $0xb8] sm:$0xff]
  %v1325 = vld [vmem:[%s2 + $0xc0] sm:$0xff]
  %v1326 = vld [vmem:[%s2 + $0xc8] sm:$0xff]
  %v1327 = vld [vmem:[%s2 + $0xd0] sm:$0xff]
  %v1328 = vld [vmem:[%s2 + $0xd8] sm:$0xff]
  %v1329 = vld [vmem:[%s2 + $0xe0] sm:$0xff]
  %v1330 = vld [vmem:[%s2 + $0xe8] sm:$0xff]
  %v1331 = vld [vmem:[%s2 + $0xf0] sm:$0xff]
  %v1332 = vld [vmem:[%s2 + $0xf8] sm:$0xff]
  %v1333 = vld [vmem:[%s2 + $0x100] sm:$0xff]
  %v1334 = vld [vmem:[%s2 + $0x108] sm:$0xff]
  %1335 = vmatprep.subr.mxu0 0.0
  %1336 = vmatpush1.msra.mxu0 %v1303
  %1337 = vmatprep.subr.mxu0 0.0
  %1338 = vmatpush1.msra.mxu0 %v1304
  %1339 = vmatprep.subr.mxu0 0.0
  %1340 = vmatpush1.msra.mxu0 %v1305
  %1341 = vmatprep.subr.mxu0 0.0
  %1342 = vmatpush1.msra.mxu0 %v1306
  %1343 = vmatprep.subr.mxu0 0.0
  %1344 = vmatpush1.msra.mxu0 %v1307
  %1345 = vmatprep.subr.mxu0 0.0
  %1346 = vmatpush1.msra.mxu0 %v1308
  %1347 = vmatprep.subr.mxu0 0.0
  %1348 = vmatpush1.msra.mxu0 %v1309
  %1349 = vmatprep.subr.mxu0 0.0
  %1350 = vmatpush1.msra.mxu0 %v1310
  %1351 = vmatprep.subr.mxu0 0.0
  %1352 = vmatpush1.msra.mxu0 %v1311
  %1353 = vmatprep.subr.mxu0 0.0
  %1354 = vmatpush1.msra.mxu0 %v1312
  %1355 = vmatprep.subr.mxu0 0.0
  %1356 = vmatpush1.msra.mxu0 %v1313
  %1357 = vmatprep.subr.mxu0 0.0
  %1358 = vmatpush1.msra.mxu0 %v1314
  %1359 = vmatprep.subr.mxu0 0.0
  %1360 = vmatpush1.msra.mxu0 %v1315
  %1361 = vmatprep.subr.mxu0 0.0
  %1362 = vmatpush1.msra.mxu0 %v1316
  %1363 = vmatprep.subr.mxu0 0.0
  %1364 = vmatpush1.msra.mxu0 %v1317
  %1365 = vmatprep.subr.mxu0 0.0
  %1366 = vmatpush1.msra.mxu0 %v1318
  %1367 = vmatprep.subr.mxu0 0.0
  %1368 = vmatpush1.msra.mxu0 %v1319
  %1369 = vmatprep.subr.mxu0 0.0
  %1370 = vmatpush1.msra.mxu0 %v1320
  %1371 = vmatprep.subr.mxu0 0.0
  %1372 = vmatpush1.msra.mxu0 %v1321
  %1373 = vmatprep.subr.mxu0 0.0
  %1374 = vmatpush1.msra.mxu0 %v1322
  %1375 = vmatprep.subr.mxu0 0.0
  %1376 = vmatpush1.msra.mxu0 %v1323
  %1377 = vmatprep.subr.mxu0 0.0
  %1378 = vmatpush1.msra.mxu0 %v1324
  %1379 = vmatprep.subr.mxu0 0.0
  %1380 = vmatpush1.msra.mxu0 %v1325
  %1381 = vmatprep.subr.mxu0 0.0
  %1382 = vmatpush1.msra.mxu0 %v1326
  %1383 = vmatprep.subr.mxu0 0.0
  %1384 = vmatpush1.msra.mxu0 %v1327
  %1385 = vmatprep.subr.mxu0 0.0
  %1386 = vmatpush1.msra.mxu0 %v1328
  %1387 = vmatprep.subr.mxu0 0.0
  %1388 = vmatpush1.msra.mxu0 %v1329
  %1389 = vmatprep.subr.mxu0 0.0
  %1390 = vmatpush1.msra.mxu0 %v1330
  %1391 = vmatprep.subr.mxu0 0.0
  %1392 = vmatpush1.msra.mxu0 %v1331
  %1393 = vmatprep.subr.mxu0 0.0
  %1394 = vmatpush1.msra.mxu0 %v1332
  %1395 = vmatprep.subr.mxu0 0.0
  %1396 = vmatpush1.msra.mxu0 %v1333
  %1397 = vmatprep.subr.mxu0 0.0
  %1398 = vmatpush1.msra.mxu0 %v1334
  %1399 = vmatprep.mubr.f32.mxu0 %v1300
  %1400 = vmatmul.mubr.f32.gmra.mrb[0].mxu0 %v1299
  %v1401 = vpop.f32.mrb[0].mxu0
  %v1402 = vadd.f32 0.0, %v1401
  %v1403 = vpop.f32.mrb[0].mxu0
  %1404 = vmatprep.mubr.f32.mxu0 %v1302
  %1405 = vmatmul.mubr.f32.gmra.mrb[0].mxu0 %v1301
  %v1406 = vpop.f32.mrb[0].mxu0
  %v1407 = vadd.f32 0.0, %v1406
  %v1408 = vpop.f32.mrb[0].mxu0
  %1409 = vdwg.mxu0
  %v1410 = vld [vmem:[%s2 + $0x190] sm:$0xff]
  %v1411 = vld [vmem:[%s2 + $0x198] sm:$0xff]
  %v1412 = vld [vmem:[%s2 + $0x1a0] sm:$0xff]
  %v1413 = vld [vmem:[%s2 + $0x1a8] sm:$0x3f]
  %vm1414 = vcmask 97280
  %v1416 = vsel %vm1414, %v1410, 0
  %v1419 = vsel %vm1414, %v1411, 0
  %v1422 = vsel %vm1414, %v1412, 0
  %v1425 = vsel %vm1414, %v1413, 0
  %v1428 = vsel %vm407, %v1407, 0
  %1430 = vmatprep.subr.mxu0 0.0
  %1431 = vmatpush1.msra.mxu0 %v1402
  %1432 = vmatprep.subr.mxu0 0.0
  %1433 = vmatpush1.msra.mxu0 %v1428
  %1434 = vmatprep.subr.mxu0 0.0
  %1435 = vmatpush1.msra.mxu0 0.0
  %1436 = vmatprep.subr.mxu0 0.0
  %1437 = vmatpush1.msra.mxu0 0.0
  %1438 = vmatprep.subr.mxu0 0.0
  %1439 = vmatpush1.msra.mxu0 0.0
  %1440 = vmatprep.subr.mxu0 0.0
  %1441 = vmatpush1.msra.mxu0 0.0
  %1442 = vmatprep.subr.mxu0 0.0
  %1443 = vmatpush1.msra.mxu0 0.0
  %1444 = vmatprep.subr.mxu0 0.0
  %1445 = vmatpush1.msra.mxu0 0.0
  %1446 = vmatprep.subr.mxu0 0.0
  %1447 = vmatpush1.msra.mxu0 0.0
  %1448 = vmatprep.subr.mxu0 0.0
  %1449 = vmatpush1.msra.mxu0 0.0
  %1450 = vmatprep.subr.mxu0 0.0
  %1451 = vmatpush1.msra.mxu0 0.0
  %1452 = vmatprep.subr.mxu0 0.0
  %1453 = vmatpush1.msra.mxu0 0.0
  %1454 = vmatprep.subr.mxu0 0.0
  %1455 = vmatpush1.msra.mxu0 0.0
  %1456 = vmatprep.subr.mxu0 0.0
  %1457 = vmatpush1.msra.mxu0 0.0
  %1458 = vmatprep.subr.mxu0 0.0
  %1459 = vmatpush1.msra.mxu0 0.0
  %1460 = vmatprep.subr.mxu0 0.0
  %1461 = vmatpush1.msra.mxu0 0.0
  %1462 = vmatprep.subr.mxu0 0.0
  %1463 = vmatpush1.msra.mxu0 0.0
  %1464 = vmatprep.subr.mxu0 0.0
  %1465 = vmatpush1.msra.mxu0 0.0
  %1466 = vmatprep.subr.mxu0 0.0
  %1467 = vmatpush1.msra.mxu0 0.0
  %1468 = vmatprep.subr.mxu0 0.0
  %1469 = vmatpush1.msra.mxu0 0.0
  %1470 = vmatprep.subr.mxu0 0.0
  %1471 = vmatpush1.msra.mxu0 0.0
  %1472 = vmatprep.subr.mxu0 0.0
  %1473 = vmatpush1.msra.mxu0 0.0
  %1474 = vmatprep.subr.mxu0 0.0
  %1475 = vmatpush1.msra.mxu0 0.0
  %1476 = vmatprep.subr.mxu0 0.0
  %1477 = vmatpush1.msra.mxu0 0.0
  %1478 = vmatprep.subr.mxu0 0.0
  %1479 = vmatpush1.msra.mxu0 0.0
  %1480 = vmatprep.subr.mxu0 0.0
  %1481 = vmatpush1.msra.mxu0 0.0
  %1482 = vmatprep.subr.mxu0 0.0
  %1483 = vmatpush1.msra.mxu0 0.0
  %1484 = vmatprep.subr.mxu0 0.0
  %1485 = vmatpush1.msra.mxu0 0.0
  %1486 = vmatprep.subr.mxu0 0.0
  %1487 = vmatpush1.msra.mxu0 0.0
  %1488 = vmatprep.subr.mxu0 0.0
  %1489 = vmatpush1.msra.mxu0 0.0
  %1490 = vmatprep.subr.mxu0 0.0
  %1491 = vmatpush1.msra.mxu0 0.0
  %1492 = vmatprep.subr.mxu0 0.0
  %1493 = vmatpush1.msra.mxu0 0.0
  %1494 = vmatprep.mubr.f32.mxu0 0.0
  %1495 = vmatmul.mubr.f32.gmra.mrb[0].mxu0 %v1416
  %v1496 = vpop.f32.mrb[0].mxu0
  %v1497 = vadd.f32 0.0, %v1496
  %v1498 = vpop.f32.mrb[0].mxu0
  %1499 = vmatprep.mubr.f32.mxu0 0.0
  %1500 = vmatmul.mubr.f32.gmra.mrb[0].mxu0 %v1419
  %v1501 = vpop.f32.mrb[0].mxu0
  %v1502 = vadd.f32 0.0, %v1501
  %v1503 = vpop.f32.mrb[0].mxu0
  %1504 = vmatprep.mubr.f32.mxu0 0.0
  %1505 = vmatmul.mubr.f32.gmra.mrb[0].mxu0 %v1422
  %v1506 = vpop.f32.mrb[0].mxu0
  %v1507 = vadd.f32 0.0, %v1506
  %v1508 = vpop.f32.mrb[0].mxu0
  %1509 = vmatprep.mubr.f32.mxu0 0.0
  %1510 = vmatmul.mubr.f32.gmra.mrb[0].mxu0 %v1425
  %v1511 = vpop.f32.mrb[0].mxu0
  %v1512 = vadd.f32 0.0, %v1511
  %v1513 = vpop.f32.mrb[0].mxu0
  %1514 = vdwg.mxu0
  %vm1515 = vcmask 1045504
  %v1516 = vsel %vm1515, %v1512, -inf
  %v1517 = vmax.f32 %v1497, %v1502
  %v1518 = vmax.f32 %v1507, %v1516
  %v1519 = vmax.f32 %v1517, %v1518
  %v1520 = vrot.slane %v1519, 4
  %v1521 = vmax.f32 %v1519, %v1520
  %v1522 = vrot.slane %v1521, 2
  %v1523 = vmax.f32 %v1521, %v1522
  %v1524 = vrot.slane %v1523, 1
  %v1525 = vmax.f32 %v1523, %v1524
  %v1526 = vsub.f32 %v1497, %v1525
  %v1527 = vsub.f32 %v1502, %v1525
  %v1528 = vsub.f32 %v1507, %v1525
  %v1529 = vsub.f32 %v1512, %v1525
  %v1530 = vmul.f32 %v1526, 1.442695
  %v1531 = vpow.pop %v1530
  %v1532 = vmul.f32 %v1527, 1.442695
  %v1533 = vpow.pop %v1532
  %v1534 = vmul.f32 %v1528, 1.442695
  %v1535 = vpow.pop %v1534
  %v1536 = vmul.f32 %v1529, 1.442695
  %v1537 = vpow.pop %v1536
  %v1538 = vadd.f32 %v1531, %v1533
  %v1539 = vadd.f32 %v1538, %v1535
  %v1540 = vsel %vm1515, %v1537, 0.0
  %v1541 = vadd.f32 %v1539, %v1540
  %v1542 = vrot.slane %v1541, 4
  %v1543 = vadd.f32 %v1541, %v1542
  %v1544 = vrot.slane %v1543, 2
  %v1545 = vadd.f32 %v1543, %v1544
  %v1546 = vrot.slane %v1545, 1
  %v1547 = vadd.f32 %v1545, %v1546
  %v1548 = vlog2.pop %v1547
  %v1549 = vmul.f32 %v1548, 0.6931472
  %v1550 = vadd.f32 %v1549, %v1525
  %v1551 = vsub.f32 %v1497, %v1550
  %v1552 = vsub.f32 %v1502, %v1550
  %v1553 = vsub.f32 %v1507, %v1550
  %v1554 = vsub.f32 %v1512, %v1550
  %v1555 = vmul.f32 %v1551, -3.0
  %v1556 = vmul.f32 %v1552, -3.0
  %v1557 = vmul.f32 %v1553, -3.0
  %v1558 = vmul.f32 %v1554, -3.0
  %v1559 = vmul.f32 %v1555, 1.442695
  %v1560 = vpow.pop %v1559
  %v1561 = vmul.f32 %v1556, 1.442695
  %v1562 = vpow.pop %v1561
  %v1563 = vmul.f32 %v1557, 1.442695
  %v1564 = vpow.pop %v1563
  %v1565 = vmul.f32 %v1558, 1.442695
  %v1566 = vpow.pop %v1565
  %v1567 = vadd.f32 %v1560, 1.0
  %v1568 = vadd.f32 %v1562, 1.0
  %v1569 = vadd.f32 %v1564, 1.0
  %v1570 = vadd.f32 %v1566, 1.0
  %v1571 = vrcp.pop %v1567
  %v1572 = vrcp.pop %v1568
  %v1573 = vrcp.pop %v1569
  %v1574 = vrcp.pop %v1570
  %v1575 = vld [vmem:[%s2 + $0x110] sm:$0xff]
  %v1576 = vld [vmem:[%s2 + $0x118] sm:$0xff]
  %v1577 = vld [vmem:[%s2 + $0x120] sm:$0xff]
  %v1578 = vld [vmem:[%s2 + $0x128] sm:$0xff]
  %v1579 = vld [vmem:[%s2 + $0x130] sm:$0xff]
  %v1580 = vld [vmem:[%s2 + $0x138] sm:$0xff]
  %v1581 = vld [vmem:[%s2 + $0x140] sm:$0xff]
  %v1582 = vld [vmem:[%s2 + $0x148] sm:$0xff]
  %v1583 = vld [vmem:[%s2 + $0x150] sm:$0xff]
  %v1584 = vld [vmem:[%s2 + $0x158] sm:$0xff]
  %v1585 = vld [vmem:[%s2 + $0x160] sm:$0xff]
  %v1586 = vld [vmem:[%s2 + $0x168] sm:$0xff]
  %v1587 = vld [vmem:[%s2 + $0x170] sm:$0xff]
  %v1588 = vld [vmem:[%s2 + $0x178] sm:$0xff]
  %v1589 = vld [vmem:[%s2 + $0x180] sm:$0xff]
  %v1590 = vld [vmem:[%s2 + $0x188] sm:$0xff]
  %1591 = vmatprep.subr.mxu0 0.0
  %1592 = vmatpush1.msra.mxu0 %v1575
  %1593 = vmatprep.subr.mxu0 0.0
  %1594 = vmatpush1.msra.mxu0 %v1576
  %1595 = vmatprep.subr.mxu0 0.0
  %1596 = vmatpush1.msra.mxu0 %v1577
  %1597 = vmatprep.subr.mxu0 0.0
  %1598 = vmatpush1.msra.mxu0 %v1578
  %1599 = vmatprep.subr.mxu0 0.0
  %1600 = vmatpush1.msra.mxu0 %v1579
  %1601 = vmatprep.subr.mxu0 0.0
  %1602 = vmatpush1.msra.mxu0 %v1580
  %1603 = vmatprep.subr.mxu0 0.0
  %1604 = vmatpush1.msra.mxu0 %v1581
  %1605 = vmatprep.subr.mxu0 0.0
  %1606 = vmatpush1.msra.mxu0 %v1582
  %1607 = vmatprep.subr.mxu0 0.0
  %1608 = vmatpush1.msra.mxu0 %v1583
  %1609 = vmatprep.subr.mxu0 0.0
  %1610 = vmatpush1.msra.mxu0 %v1584
  %1611 = vmatprep.subr.mxu0 0.0
  %1612 = vmatpush1.msra.mxu0 %v1585
  %1613 = vmatprep.subr.mxu0 0.0
  %1614 = vmatpush1.msra.mxu0 %v1586
  %1615 = vmatprep.subr.mxu0 0.0
  %1616 = vmatpush1.msra.mxu0 %v1587
  %1617 = vmatprep.subr.mxu0 0.0
  %1618 = vmatpush1.msra.mxu0 %v1588
  %1619 = vmatprep.subr.mxu0 0.0
  %1620 = vmatpush1.msra.mxu0 %v1589
  %1621 = vmatprep.subr.mxu0 0.0
  %1622 = vmatpush1.msra.mxu0 %v1590
  %1623 = vmatprep.subr.mxu0 0.0
  %1624 = vmatpush1.msra.mxu0 0.0
  %1625 = vmatprep.subr.mxu0 0.0
  %1626 = vmatpush1.msra.mxu0 0.0
  %1627 = vmatprep.subr.mxu0 0.0
  %1628 = vmatpush1.msra.mxu0 0.0
  %1629 = vmatprep.subr.mxu0 0.0
  %1630 = vmatpush1.msra.mxu0 0.0
  %1631 = vmatprep.subr.mxu0 0.0
  %1632 = vmatpush1.msra.mxu0 0.0
  %1633 = vmatprep.subr.mxu0 0.0
  %1634 = vmatpush1.msra.mxu0 0.0
  %1635 = vmatprep.subr.mxu0 0.0
  %1636 = vmatpush1.msra.mxu0 0.0
  %1637 = vmatprep.subr.mxu0 0.0
  %1638 = vmatpush1.msra.mxu0 0.0
  %1639 = vmatprep.subr.mxu0 0.0
  %1640 = vmatpush1.msra.mxu0 0.0
  %1641 = vmatprep.subr.mxu0 0.0
  %1642 = vmatpush1.msra.mxu0 0.0
  %1643 = vmatprep.subr.mxu0 0.0
  %1644 = vmatpush1.msra.mxu0 0.0
  %1645 = vmatprep.subr.mxu0 0.0
  %1646 = vmatpush1.msra.mxu0 0.0
  %1647 = vmatprep.subr.mxu0 0.0
  %1648 = vmatpush1.msra.mxu0 0.0
  %1649 = vmatprep.subr.mxu0 0.0
  %1650 = vmatpush1.msra.mxu0 0.0
  %1651 = vmatprep.subr.mxu0 0.0
  %1652 = vmatpush1.msra.mxu0 0.0
  %1653 = vmatprep.subr.mxu0 0.0
  %1654 = vmatpush1.msra.mxu0 0.0
  %1655 = vmatprep.mubr.f32.mxu0 0.0
  %1656 = vmatmul.mubr.f32.gmra.mrb[0].mxu0 %v1571
  %v1657 = vpop.f32.mrb[0].mxu0
  %v1658 = vadd.f32 0.0, %v1657
  %v1659 = vpop.f32.mrb[0].mxu0
  %1660 = vmatprep.mubr.f32.mxu0 0.0
  %1661 = vmatmul.mubr.f32.gmra.mrb[0].mxu0 %v1572
  %v1662 = vpop.f32.mrb[0].mxu0
  %v1663 = vadd.f32 0.0, %v1662
  %v1664 = vpop.f32.mrb[0].mxu0
  %1665 = vmatprep.mubr.f32.mxu0 0.0
  %1666 = vmatmul.mubr.f32.gmra.mrb[0].mxu0 %v1573
  %v1667 = vpop.f32.mrb[0].mxu0
  %v1668 = vadd.f32 0.0, %v1667
  %v1669 = vpop.f32.mrb[0].mxu0
  %1670 = vmatprep.mubr.f32.mxu0 0.0
  %1671 = vmatmul.mubr.f32.gmra.mrb[0].mxu0 %v1574
  %v1672 = vpop.f32.mrb[0].mxu0
  %v1673 = vadd.f32 0.0, %v1672
  %v1674 = vpop.f32.mrb[0].mxu0
  %1675 = vdwg.mxu0
  %v1676 = vlaneseq
  %v1677 = vand.u32 %v1676, 127
  %vm1678 = vcmp.lt.s32.totalorder %v1677, 60
  %v1679 = vsub.f32 %v1571, %v1658
  %v1680 = vsub.f32 %v1572, %v1663
  %v1681 = vsub.f32 %v1573, %v1668
  %v1682 = vsub.f32 %v1574, %v1673
  %v1683 = vadd.f32 %v1679, 1e-06
  %v1684 = vadd.f32 %v1680, 1e-06
  %v1685 = vadd.f32 %v1681, 1e-06
  %v1686 = vadd.f32 %v1682, 1e-06
  %v1687 = vand.u32 2147483647, %v1683
  %v1688 = vand.u32 2147483647, %v1684
  %v1689 = vand.u32 2147483647, %v1685
  %v1690 = vand.u32 2147483647, %v1686
  %v1691 = vsel %vm1678, %v1687, 0.0
  %v1692 = vsel %vm1678, %v1688, 0.0
  %v1693 = vsel %vm1678, %v1689, 0.0
  %v1694 = vsel %vm1678, %v1690, 0.0
  %v1695 = vadd.f32 %v1691, %v1692
  %v1696 = vadd.f32 %v1695, %v1693
  %v1697 = vsel %vm1515, %v1694, 0.0
  %v1698 = vadd.f32 %v1696, %v1697
  %1699 = vadd.xlane.f32.xlu0 %v1698
  %v1700 = vpop.xlane.xlu0 %1699
  %v1701 = vrot.slane %v1700, 4
  %v1702 = vadd.f32 %v1700, %v1701
  %v1703 = vrot.slane %v1702, 2
  %v1704 = vadd.f32 %v1702, %v1703
  %v1705 = vrot.slane %v1704, 1
  %v1706 = vadd.f32 %v1704, %v1705
  %s1707 = vtos %v1706
  %s1708 = smul.f32 %s1707, 0.00055555557
  %v1709 = vld [vmem:[%s2 + $0x1b0] sm:$0xff]
  %vm1710 = vcmask 244736
  %v1712 = vsel %vm1710, %v1709, 0
  %v1715 = vsel %vm1515, %v1512, 0
  %1717 = vmatprep.subr.mxu0 0.0
  %1718 = vmatpush1.msra.mxu0 %v1497
  %1719 = vmatprep.subr.mxu0 0.0
  %1720 = vmatpush1.msra.mxu0 %v1502
  %1721 = vmatprep.subr.mxu0 0.0
  %1722 = vmatpush1.msra.mxu0 %v1507
  %1723 = vmatprep.subr.mxu0 0.0
  %1724 = vmatpush1.msra.mxu0 %v1715
  %1725 = vmatprep.subr.mxu0 0.0
  %1726 = vmatpush1.msra.mxu0 0.0
  %1727 = vmatprep.subr.mxu0 0.0
  %1728 = vmatpush1.msra.mxu0 0.0
  %1729 = vmatprep.subr.mxu0 0.0
  %1730 = vmatpush1.msra.mxu0 0.0
  %1731 = vmatprep.subr.mxu0 0.0
  %1732 = vmatpush1.msra.mxu0 0.0
  %1733 = vmatprep.subr.mxu0 0.0
  %1734 = vmatpush1.msra.mxu0 0.0
  %1735 = vmatprep.subr.mxu0 0.0
  %1736 = vmatpush1.msra.mxu0 0.0
  %1737 = vmatprep.subr.mxu0 0.0
  %1738 = vmatpush1.msra.mxu0 0.0
  %1739 = vmatprep.subr.mxu0 0.0
  %1740 = vmatpush1.msra.mxu0 0.0
  %1741 = vmatprep.subr.mxu0 0.0
  %1742 = vmatpush1.msra.mxu0 0.0
  %1743 = vmatprep.subr.mxu0 0.0
  %1744 = vmatpush1.msra.mxu0 0.0
  %1745 = vmatprep.subr.mxu0 0.0
  %1746 = vmatpush1.msra.mxu0 0.0
  %1747 = vmatprep.subr.mxu0 0.0
  %1748 = vmatpush1.msra.mxu0 0.0
  %1749 = vmatprep.subr.mxu0 0.0
  %1750 = vmatpush1.msra.mxu0 0.0
  %1751 = vmatprep.subr.mxu0 0.0
  %1752 = vmatpush1.msra.mxu0 0.0
  %1753 = vmatprep.subr.mxu0 0.0
  %1754 = vmatpush1.msra.mxu0 0.0
  %1755 = vmatprep.subr.mxu0 0.0
  %1756 = vmatpush1.msra.mxu0 0.0
  %1757 = vmatprep.subr.mxu0 0.0
  %1758 = vmatpush1.msra.mxu0 0.0
  %1759 = vmatprep.subr.mxu0 0.0
  %1760 = vmatpush1.msra.mxu0 0.0
  %1761 = vmatprep.subr.mxu0 0.0
  %1762 = vmatpush1.msra.mxu0 0.0
  %1763 = vmatprep.subr.mxu0 0.0
  %1764 = vmatpush1.msra.mxu0 0.0
  %1765 = vmatprep.subr.mxu0 0.0
  %1766 = vmatpush1.msra.mxu0 0.0
  %1767 = vmatprep.subr.mxu0 0.0
  %1768 = vmatpush1.msra.mxu0 0.0
  %1769 = vmatprep.subr.mxu0 0.0
  %1770 = vmatpush1.msra.mxu0 0.0
  %1771 = vmatprep.subr.mxu0 0.0
  %1772 = vmatpush1.msra.mxu0 0.0
  %1773 = vmatprep.subr.mxu0 0.0
  %1774 = vmatpush1.msra.mxu0 0.0
  %1775 = vmatprep.subr.mxu0 0.0
  %1776 = vmatpush1.msra.mxu0 0.0
  %1777 = vmatprep.subr.mxu0 0.0
  %1778 = vmatpush1.msra.mxu0 0.0
  %1779 = vmatprep.subr.mxu0 0.0
  %1780 = vmatpush1.msra.mxu0 0.0
  %1781 = vmatprep.mubr.f32.mxu0 0.0
  %1782 = vmatmul.mubr.f32.gmra.mrb[0].mxu0 %v1712
  %v1783 = vpop.f32.mrb[0].mxu0
  %v1784 = vadd.f32 0.0, %v1783
  %v1785 = vpop.f32.mrb[0].mxu0
  %1786 = vdwg.mxu0
  %v1787 = vsel %vm407, %v1784, -inf
  %v1788 = vrot.slane %v1787, 4
  %v1789 = vmax.f32 %v1787, %v1788
  %v1790 = vrot.slane %v1789, 2
  %v1791 = vmax.f32 %v1789, %v1790
  %v1792 = vrot.slane %v1791, 1
  %v1793 = vmax.f32 %v1791, %v1792
  %v1794 = vsub.f32 %v1784, %v1793
  %v1795 = vmul.f32 %v1794, 1.442695
  %v1796 = vpow.pop %v1795
  %v1797 = vsel %vm407, %v1796, 0.0
  %v1798 = vrot.slane %v1797, 4
  %v1799 = vadd.f32 %v1797, %v1798
  %v1800 = vrot.slane %v1799, 2
  %v1801 = vadd.f32 %v1799, %v1800
  %v1802 = vrot.slane %v1801, 1
  %v1803 = vadd.f32 %v1801, %v1802
  %v1804 = vlog2.pop %v1803
  %v1805 = vmul.f32 %v1804, 0.6931472
  %v1806 = vadd.f32 %v1805, %v1793
  %v1807 = vsub.f32 %v1784, %v1806
  %v1808 = vlaneseq
  %v1809 = vshrl.u32 %v1808, 7
  %vm1810 = vcmp.eq.s32.totalorder %v1809, 4
  %vm1811 = vcmp.eq.s32.totalorder %v1677, 0
  %vm1812 = vmand %vm1810, %vm1811
  %v1813 = vstv %s1708
  %v1814 = vsel %vm1812, %v1813, %v1807
  %1815 = vst [vmem:[%s4] sm:$0xff] %v1814
  // Predicated region
  $region18: #{itnet_forward.1} parent=0 // pred_check
    _
  $region19: #{itnet_forward.1} parent=0 // pred_check_branch
    %1817 = sbr.rel (0) target = $region21
  $region20: #{itnet_forward.1} parent=0 // pred_region
    _
  $region21: #{itnet_forward.1} parent=0 // pred_fallthru
    _
  // Predicated region
  $region22: #{itnet_forward.1} parent=0 // pred_check
    _
  $region23: #{itnet_forward.1} parent=0 // pred_check_branch
    %1819 = sbr.rel (0) target = $region25
  $region24: #{itnet_forward.1} parent=0 // pred_region
    _
  $region25: #{itnet_forward.1} parent=0 // pred_fallthru
    _

</llo_original>
